<compile_context>
chip_gen: v6e
topology: v6e:2x2x1
jax: 0.10.0
libtpu: 0.0.40
codegen_flags: <defaults>
</compile_context>

<pallas_src>
import jax
import jax.numpy as jnp
from jax.experimental import pallas as pl
from jax.experimental.pallas import tpu as pltpu

D_IN = 28 * 28       # 784 (multiple of 16 -> legal bf16 sublane extent, no K padding)
H1 = 312
H1_PAD = 384         # 312 -> 3 * 128 lanes
H2 = 256             # already lane aligned
D_OUT = 10
D_OUT_PAD = 128      # 10 -> 128 (lane-dense output stores)

_MAX_TB = 1024       # ~15 MiB VMEM working set at TB=1024; fits v7x's 32 MiB scoped default
_MIN_SPLIT_B = 1024  # once batch reaches this, force >= 2 grid steps (v7x megacore)


def _round_up(n, m):
    return ((n + m - 1) // m) * m


def _probe_single_buffered():
    """pl.Buffered(1) removes the redundant second buffer of grid-invariant
    operands (weights/biases).  Probe it once so that an unsupported
    pipeline_mode on this jax/libtpu degrades gracefully instead of breaking
    the whole forward pass."""
    try:
        mode = pl.Buffered(1)

        def k(w_ref, x_ref, o_ref):
            o_ref[...] = x_ref[...] + w_ref[...]

        fn = pl.pallas_call(
            k,
            out_shape=jax.ShapeDtypeStruct((16, 128), jnp.float32),
            grid=(2,),
            in_specs=[
                pl.BlockSpec((8, 128), lambda i: (0, 0), pipeline_mode=mode),
                pl.BlockSpec((8, 128), lambda i: (i, 0)),
            ],
            out_specs=pl.BlockSpec((8, 128), lambda i: (i, 0)),
        )
        jax.block_until_ready(
            fn(jnp.ones((8, 128), jnp.float32), jnp.ones((16, 128), jnp.float32)))
        return mode
    except Exception:
        return None


_SINGLE_BUFFERED = _probe_single_buffered()


def _resident_spec(shape):
    """Grid-invariant operand: same block every step -> stays VMEM-resident,
    fetched from HBM once; single-buffered when supported."""
    index_map = lambda i: (0,) * len(shape)
    if _SINGLE_BUFFERED is not None:
        return pl.BlockSpec(shape, index_map, pipeline_mode=_SINGLE_BUFFERED)
    return pl.BlockSpec(shape, index_map)


def mlp_kernel(x_ref, w1_ref, b1_ref, w2_ref, b2_ref, w3_ref, b3_ref, o_ref):
    # x_ref: (TB, 784) f32 ; weights bf16 (MXU-native) ; biases f32 ; output f32.
    x = x_ref[...].astype(jnp.bfloat16)            # cast on-chip (VPU); x never re-read from HBM
    # Stage 1: Linear(784 -> 312) + ReLU   (out padded to 384 lanes, zero cols exact)
    h1 = jnp.dot(x, w1_ref[...], preferred_element_type=jnp.float32)
    h1 = jnp.maximum(h1 + b1_ref[...], 0.0)
    # Stage 2: Linear(312 -> 256) + ReLU   (padded rows of w2 are zero -> exact)
    h2 = jnp.dot(h1.astype(jnp.bfloat16), w2_ref[...],
                 preferred_element_type=jnp.float32)
    h2 = jnp.maximum(h2 + b2_ref[...], 0.0)
    # Stage 3: Linear(256 -> 10), no activation   (10 padded to 128 lanes)
    out = jnp.dot(h2.astype(jnp.bfloat16), w3_ref[...],
                  preferred_element_type=jnp.float32)
    o_ref[...] = (out + b3_ref[...]).astype(o_ref.dtype)


def _choose_batch_tiling(B):
    """Pick (tile rows, padded batch).  Cap the tile at _MAX_TB, keep >= 2 grid
    steps for large batches (both v7x TensorCores), and bound the batch pad to
    a handful of rows instead of up to TB-1."""
    b8 = _round_up(B, 8)
    n_steps = max(1, pl.cdiv(b8, _MAX_TB))
    if n_steps == 1 and b8 >= _MIN_SPLIT_B:
        n_steps = 2
    tb = _round_up(pl.cdiv(b8, n_steps), 8)
    return tb, n_steps * tb


def prepare_params(w1, b1, w2, b2, w3, b3):
    """Pad + cast parameters ONCE at model-load time (hoisted out of the
    per-call jit path).  Expects weights in (in_features, out_features) layout;
    note a PyTorch nn.Linear checkpoint stores (out, in) and must be transposed
    when porting real weights."""
    w1_p = jnp.zeros((D_IN, H1_PAD), jnp.bfloat16).at[:, :H1].set(w1.astype(jnp.bfloat16))
    b1_p = jnp.zeros((1, H1_PAD), jnp.float32).at[:, :H1].set(
        b1.reshape(1, H1).astype(jnp.float32))
    w2_p = jnp.zeros((H1_PAD, H2), jnp.bfloat16).at[:H1, :].set(w2.astype(jnp.bfloat16))
    b2_p = b2.reshape(1, H2).astype(jnp.float32)
    w3_p = jnp.zeros((H2, D_OUT_PAD), jnp.bfloat16).at[:, :D_OUT].set(w3.astype(jnp.bfloat16))
    b3_p = jnp.zeros((1, D_OUT_PAD), jnp.float32).at[:, :D_OUT].set(
        b3.reshape(1, D_OUT).astype(jnp.float32))
    return w1_p, b1_p, w2_p, b2_p, w3_p, b3_p


@jax.jit
def neural_network_forward(x_nchw, w1_p, b1_p, w2_p, b2_p, w3_p, b3_p):
    """Forward pass of the PyTorch NeuralNetwork: (B,1,28,28) f32 -> (B,10) f32."""
    B = x_nchw.shape[0]
    x = x_nchw.reshape(B, D_IN)                 # nn.Flatten(): keep batch, flatten the rest
    TB, B_pad = _choose_batch_tiling(B)
    if B_pad != B:
        # Only the ragged tail rows (bounded small by _choose_batch_tiling);
        # no padded/cast full copy of x is materialized anymore.
        x = jnp.pad(x, ((0, B_pad - B), (0, 0)))

    out_padded = pl.pallas_call(
        mlp_kernel,
        out_shape=jax.ShapeDtypeStruct((B_pad, D_OUT_PAD), jnp.float32),
        grid=(B_pad // TB,),
        in_specs=[
            # activations: batch-tiled, raw f32, last dim = full 784 extent
            pl.BlockSpec((TB, D_IN), lambda i: (i, 0)),
            _resident_spec((D_IN, H1_PAD)), _resident_spec((1, H1_PAD)),
            _resident_spec((H1_PAD, H2)),   _resident_spec((1, H2)),
            _resident_spec((H2, D_OUT_PAD)), _resident_spec((1, D_OUT_PAD)),
        ],
        out_specs=pl.BlockSpec((TB, D_OUT_PAD), lambda i: (i, 0)),
        compiler_params=pltpu.CompilerParams(
            dimension_semantics=("parallel",),
            vmem_limit_bytes=32 * 1024 * 1024,
        ),
    )(x, w1_p, b1_p, w2_p, b2_p, w3_p, b3_p)

    # strip batch padding and the 10 -> 128 lane padding of the logits
    return out_padded[:B, :D_OUT]


def init_linear_params(key, fan_in, fan_out):
    """Deterministic init mimicking torch.nn.Linear defaults U(-1/sqrt(fan_in), +)."""
    kw, kb = jax.random.split(key)
    bound = 1.0 / jnp.sqrt(jnp.float32(fan_in))
    # stored as (in, out) so the kernel does x @ W (same math as torch's x @ W.T)
    w = jax.random.uniform(kw, (fan_in, fan_out), jnp.float32, -bound, bound)
    b = jax.random.uniform(kb, (1, fan_out), jnp.float32, -bound, bound)
    return w, b


if __name__ == "__main__":
    key = jax.random.PRNGKey(0)
    k_x, k1, k2, k3 = jax.random.split(key, 4)

    B = 8
    x = jax.random.normal(k_x, (B, 1, 28, 28), jnp.float32)

    w1, b1 = init_linear_params(k1, D_IN, H1)
    w2, b2 = init_linear_params(k2, H1, H2)
    w3, b3 = init_linear_params(k3, H2, D_OUT)

    # parameter padding/casting happens once, at "model load" time
    params = prepare_params(w1, b1, w2, b2, w3, b3)

    out = neural_network_forward(x, *params)
    out = jax.block_until_ready(out)

    # Sanity check against a pure-JAX f32 reference of the same forward pass.
    # (kernel uses bf16 matmul operands with f32 accumulation -> loosened tol)
    xf = x.reshape(B, -1)
    ref = jnp.maximum(xf @ w1 + b1, 0.0)
    ref = jnp.maximum(ref @ w2 + b2, 0.0)
    ref = ref @ w3 + b3
    assert out.shape == (B, D_OUT)
    max_err = jnp.max(jnp.abs(out - ref))
    assert jnp.allclose(out, ref, atol=5e-2, rtol=5e-2), f"max abs diff {max_err}"

    print("KERNEL_OK")
</pallas_src>

<mosaic_0001>
module attributes {stable_mosaic.version = 11 : i64} {
  func.func @k(%arg0: i32, %arg1: memref<8x128xf32, #tpu.memory_space<vmem>>, %arg2: memref<8x128xf32, #tpu.memory_space<vmem>>, %arg3: memref<8x128xf32, #tpu.memory_space<vmem>>) attributes {dimension_semantics = [#tpu.dimension_semantics<arbitrary>], iteration_bounds = array<i64: 2>, scalar_prefetch = 0 : i64, scratch_operands = 0 : i64, tpu.core_type = #tpu.core_type<tc>, window_params = [{pipeline_mode = #tpu.pipeline_mode<synchronous>, transform_indices = @transform_0, window_bounds = array<i64: 8, 128>}, {transform_indices = @transform_1, window_bounds = array<i64: 8, 128>}, {transform_indices = @transform_2, window_bounds = array<i64: 8, 128>}]} {
    %c0 = arith.constant 0 : index
    %c0_0 = arith.constant 0 : index
    %0 = vector.load %arg2[%c0, %c0_0] : memref<8x128xf32, #tpu.memory_space<vmem>>, vector<8x128xf32>
    %c0_1 = arith.constant 0 : index
    %c0_2 = arith.constant 0 : index
    %1 = vector.load %arg1[%c0_1, %c0_2] : memref<8x128xf32, #tpu.memory_space<vmem>>, vector<8x128xf32>
    %2 = arith.addf %0, %1 : vector<8x128xf32>
    %c0_3 = arith.constant 0 : index
    %c0_4 = arith.constant 0 : index
    %3 = vector.load %arg3[%c0_3, %c0_4] : memref<8x128xf32, #tpu.memory_space<vmem>>, vector<8x128xf32>
    tpu.vector_store %arg3[%c0_3, %c0_4], %2 {strides = array<i32>} : memref<8x128xf32, #tpu.memory_space<vmem>>, vector<8x128xf32>,
    return
  }
  func.func @transform_0(%arg0: i32) -> (i32, i32) {
    %c0_i32 = arith.constant 0 : i32
    %c0_i32_0 = arith.constant 0 : i32
    %c0_i32_1 = arith.constant 0 : i32
    return %c0_i32, %c0_i32_0 : i32, i32
  }
  func.func @transform_1(%arg0: i32) -> (i32, i32) {
    %c0_i32 = arith.constant 0 : i32
    %c0_i32_0 = arith.constant 0 : i32
    return %arg0, %c0_i32 : i32, i32
  }
  func.func @transform_2(%arg0: i32) -> (i32, i32) {
    %c0_i32 = arith.constant 0 : i32
    %c0_i32_0 = arith.constant 0 : i32
    return %arg0, %c0_i32 : i32, i32
  }
}

module attributes {stable_mosaic.version = 11 : i64} {
  func.func @mlp_kernel(%arg0: i32, %arg1: memref<8x784xf32, #tpu.memory_space<vmem>>, %arg2: memref<784x384xbf16, #tpu.memory_space<vmem>>, %arg3: memref<1x384xf32, #tpu.memory_space<vmem>>, %arg4: memref<384x256xbf16, #tpu.memory_space<vmem>>, %arg5: memref<1x256xf32, #tpu.memory_space<vmem>>, %arg6: memref<256x128xbf16, #tpu.memory_space<vmem>>, %arg7: memref<1x128xf32, #tpu.memory_space<vmem>>, %arg8: memref<8x128xf32, #tpu.memory_space<vmem>>) attributes {dimension_semantics = [#tpu.dimension_semantics<parallel>], iteration_bounds = array<i64: 1>, scalar_prefetch = 0 : i64, scratch_operands = 0 : i64, tpu.core_type = #tpu.core_type<tc>, window_params = [{transform_indices = @transform_0, window_bounds = array<i64: 8, 784>}, {pipeline_mode = #tpu.pipeline_mode<synchronous>, transform_indices = @transform_1, window_bounds = array<i64: 784, 384>}, {pipeline_mode = #tpu.pipeline_mode<synchronous>, transform_indices = @transform_2, window_bounds = array<i64: 1, 384>}, {pipeline_mode = #tpu.pipeline_mode<synchronous>, transform_indices = @transform_3, window_bounds = array<i64: 384, 256>}, {pipeline_mode = #tpu.pipeline_mode<synchronous>, transform_indices = @transform_4, window_bounds = array<i64: 1, 256>}, {pipeline_mode = #tpu.pipeline_mode<synchronous>, transform_indices = @transform_5, window_bounds = array<i64: 256, 128>}, {pipeline_mode = #tpu.pipeline_mode<synchronous>, transform_indices = @transform_6, window_bounds = array<i64: 1, 128>}, {transform_indices = @transform_7, window_bounds = array<i64: 8, 128>}]} {
    %c0 = arith.constant 0 : index
    %c0_0 = arith.constant 0 : index
    %0 = vector.load %arg1[%c0, %c0_0] : memref<8x784xf32, #tpu.memory_space<vmem>>, vector<8x784xf32>
    %1 = arith.truncf %0 : vector<8x784xf32> to vector<8x784xbf16>
    %c0_1 = arith.constant 0 : index
    %c0_2 = arith.constant 0 : index
    %2 = vector.load %arg2[%c0_1, %c0_2] : memref<784x384xbf16, #tpu.memory_space<vmem>>, vector<784x384xbf16>
    %cst = arith.constant dense<0.000000e+00> : vector<8x384xf32>
    %3 = tpu.matmul %1, %2, %cst {dimension_numbers = #tpu.dot_dimension_numbers<[1], [0], [0], [1], [0, 0, 1, 1], [], []>} : vector<8x784xbf16>, vector<784x384xbf16>, vector<8x384xf32> -> vector<8x384xf32>
    %c0_3 = arith.constant 0 : index
    %c0_4 = arith.constant 0 : index
    %4 = vector.load %arg3[%c0_3, %c0_4] : memref<1x384xf32, #tpu.memory_space<vmem>>, vector<1x384xf32>
    %5 = vector.broadcast %4 : vector<1x384xf32> to vector<8x384xf32>
    %6 = arith.addf %3, %5 : vector<8x384xf32>
    %cst_5 = arith.constant 0.000000e+00 : f32
    %7 = vector.broadcast %cst_5 : f32 to vector<8x384xf32>
    %8 = arith.maximumf %6, %7 : vector<8x384xf32>
    %9 = arith.truncf %8 : vector<8x384xf32> to vector<8x384xbf16>
    %c0_6 = arith.constant 0 : index
    %c0_7 = arith.constant 0 : index
    %10 = vector.load %arg4[%c0_6, %c0_7] : memref<384x256xbf16, #tpu.memory_space<vmem>>, vector<384x256xbf16>
    %cst_8 = arith.constant dense<0.000000e+00> : vector<8x256xf32>
    %11 = tpu.matmul %9, %10, %cst_8 {dimension_numbers = #tpu.dot_dimension_numbers<[1], [0], [0], [1], [0, 0, 1, 1], [], []>} : vector<8x384xbf16>, vector<384x256xbf16>, vector<8x256xf32> -> vector<8x256xf32>
    %c0_9 = arith.constant 0 : index
    %c0_10 = arith.constant 0 : index
    %12 = vector.load %arg5[%c0_9, %c0_10] : memref<1x256xf32, #tpu.memory_space<vmem>>, vector<1x256xf32>
    %13 = vector.broadcast %12 : vector<1x256xf32> to vector<8x256xf32>
    %14 = arith.addf %11, %13 : vector<8x256xf32>
    %cst_11 = arith.constant 0.000000e+00 : f32
    %15 = vector.broadcast %cst_11 : f32 to vector<8x256xf32>
    %16 = arith.maximumf %14, %15 : vector<8x256xf32>
    %17 = arith.truncf %16 : vector<8x256xf32> to vector<8x256xbf16>
    %c0_12 = arith.constant 0 : index
    %c0_13 = arith.constant 0 : index
    %18 = vector.load %arg6[%c0_12, %c0_13] : memref<256x128xbf16, #tpu.memory_space<vmem>>, vector<256x128xbf16>
    %cst_14 = arith.constant dense<0.000000e+00> : vector<8x128xf32>
    %19 = tpu.matmul %17, %18, %cst_14 {dimension_numbers = #tpu.dot_dimension_numbers<[1], [0], [0], [1], [0, 0, 1, 1], [], []>} : vector<8x256xbf16>, vector<256x128xbf16>, vector<8x128xf32> -> vector<8x128xf32>
    %c0_15 = arith.constant 0 : index
    %c0_16 = arith.constant 0 : index
    %20 = vector.load %arg7[%c0_15, %c0_16] : memref<1x128xf32, #tpu.memory_space<vmem>>, vector<1x128xf32>
    %21 = vector.broadcast %20 : vector<1x128xf32> to vector<8x128xf32>
    %22 = arith.addf %19, %21 : vector<8x128xf32>
    %c0_17 = arith.constant 0 : index
    %c0_18 = arith.constant 0 : index
    %23 = vector.load %arg8[%c0_17, %c0_18] : memref<8x128xf32, #tpu.memory_space<vmem>>, vector<8x128xf32>
    tpu.vector_store %arg8[%c0_17, %c0_18], %22 {strides = array<i32>} : memref<8x128xf32, #tpu.memory_space<vmem>>, vector<8x128xf32>,
    return
  }
  func.func @transform_0(%arg0: i32) -> (i32, i32) {
    %c0_i32 = arith.constant 0 : i32
    %c0_i32_0 = arith.constant 0 : i32
    return %arg0, %c0_i32 : i32, i32
  }
  func.func @transform_1(%arg0: i32) -> (i32, i32) {
    %c0_i32 = arith.constant 0 : i32
    %c0_i32_0 = arith.constant 0 : i32
    %c0_i32_1 = arith.constant 0 : i32
    return %c0_i32, %c0_i32_0 : i32, i32
  }
  func.func @transform_2(%arg0: i32) -> (i32, i32) {
    %c0_i32 = arith.constant 0 : i32
    %c0_i32_0 = arith.constant 0 : i32
    %c0_i32_1 = arith.constant 0 : i32
    return %c0_i32, %c0_i32_0 : i32, i32
  }
  func.func @transform_3(%arg0: i32) -> (i32, i32) {
    %c0_i32 = arith.constant 0 : i32
    %c0_i32_0 = arith.constant 0 : i32
    %c0_i32_1 = arith.constant 0 : i32
    return %c0_i32, %c0_i32_0 : i32, i32
  }
  func.func @transform_4(%arg0: i32) -> (i32, i32) {
    %c0_i32 = arith.constant 0 : i32
    %c0_i32_0 = arith.constant 0 : i32
    %c0_i32_1 = arith.constant 0 : i32
    return %c0_i32, %c0_i32_0 : i32, i32
  }
  func.func @transform_5(%arg0: i32) -> (i32, i32) {
    %c0_i32 = arith.constant 0 : i32
    %c0_i32_0 = arith.constant 0 : i32
    %c0_i32_1 = arith.constant 0 : i32
    return %c0_i32, %c0_i32_0 : i32, i32
  }
  func.func @transform_6(%arg0: i32) -> (i32, i32) {
    %c0_i32 = arith.constant 0 : i32
    %c0_i32_0 = arith.constant 0 : i32
    %c0_i32_1 = arith.constant 0 : i32
    return %c0_i32, %c0_i32_0 : i32, i32
  }
  func.func @transform_7(%arg0: i32) -> (i32, i32) {
    %c0_i32 = arith.constant 0 : i32
    %c0_i32_0 = arith.constant 0 : i32
    return %arg0, %c0_i32 : i32, i32
  }
}

</mosaic_0001>

<llo_original>
// kernel: tpu_custom_call.1
$region0: #{tpu_custom_call.1}
  #allocation0 [shape = 'u32[]', space=smem, size = 0x4, offset = 0x4, fixed_abs, tag = 'smem constant byte address 0x4 - core index']
  #allocation1 [shape = 'u32[144,128]{1,0:T(1,128)}', space=vmem, size = 0x12000, scoped, tag = 'internal scratch']
  %s0 = inlined_call_operand.hbm [shape: f32[8,128], index: 0, kind: input, shape index: {}]
  %s1 = inlined_call_operand.hbm [shape: f32[16,128], index: 1, kind: input, shape index: {}]
  %s2 = inlined_call_operand.hbm [shape: f32[16,128], index: 2, kind: output, shape index: {}]
  %s3 = sld [smem:[#allocation0]]
  $region49: #{tpu_custom_call.1} parent=0
    _
  %s5 = ssub.s32 1, %s3
  %s6 = scalar_select 0, %s5, %s3
  $region1: #{tpu_custom_call.1} parent=0
    #allocation2 [shape = 'u8[4096]{0}', space=vmem, size = 0x1000, scoped, tag = 'input window, operand 0, single buffered']
    #allocation3 [shape = 's32[2]{0}', space=sflag, size = 0x8, scoped, tag = 'scoped memory for tpu_custom_call.1']
    #allocation4 [shape = 's32[2]{0}', space=sflag, size = 0x8, scoped, tag = 'scoped memory for tpu_custom_call.1']
    #allocation5 [shape = 'u8[8192]{0}', space=vmem, size = 0x2000, scoped, tag = 'input window, operand 1']
    #allocation6 [shape = 's32[2]{0}', space=sflag, size = 0x8, scoped, tag = 'scoped memory for tpu_custom_call.1']
    #allocation7 [shape = 'u8[8192]{0}', space=vmem, size = 0x2000, scoped, tag = 'output window, operand 0']
    %7 = vsyncpa [#allocation3], 0
    %8 = vsyncpa [#allocation6], 0
    %s9 = scalar_lea.sflag [#allocation6], 1
    %10 = vsyncpa %s9, 0
    %11 = vsyncpa [#allocation4], 0
    %s12 = scalar_lea.sflag [#allocation4], 1
    %13 = vsyncpa %s12, 0
    loop: start=0, step=1, limit=4
    $region2: #{tpu_custom_call.1} parent=1 // loop_pre_header
      _
    $region3: #{tpu_custom_call.1} parent=1 // loop_header
      %s15 = sphi 0, %s19
      %p16 = scmp.ge.s32.totalorder %s15, 4
      %s23 = sphi 0, %s23
      %s25 = sphi 0, %s23
      %s26 = sphi 0, %s25
      %s40 = sphi 0, %s26
      %s46 = sphi 0, %s48
      %s49 = sphi 0, %s46
      %s50 = sphi 0, %s49
      %s66 = sphi 0, %s50
      %s72 = sphi 0, %s74
      %s75 = sphi 0, %s72
      %s76 = sphi 0, %s75
      %s92 = sphi 0, %s76
    $region4: #{tpu_custom_call.1} parent=1 // loop_header_branch
      %18 = sbr.rel (%p16) target = $region8
    $region5: #{tpu_custom_call.1} parent=1 // loop_body
      %s20 = ssub.s32 %s15, 1
      %s21 = ssub.s32 %s15, 2
      %s22 = sadd.s32 %s15, 1
      %s24 = sadd.s32 %s23, 1
      %p27 = scmp.eq.s32.totalorder %s15, 1
      %p28 = scmp.ne.s32.totalorder %s23, %s25
      %p29 = scmp.eq.s32.totalorder %s15, 0
      %p30 = por %p28, %p29
      %p31 = scmp.ne.s32.totalorder %s23, %s25
      %p32 = scmp.eq.s32.totalorder %s20, 1
      %p33 = por %p31, %p32
      %p34 = scmp.ne.s32.totalorder %s25, %s26
      %p35 = scmp.eq.s32.totalorder %s20, 0
      %p36 = por %p34, %p35
      %p37 = scmp.ne.s32.totalorder %s25, %s26
      %p38 = scmp.eq.s32.totalorder %s21, 1
      %p39 = por %p37, %p38
      %p41 = scmp.ne.s32.totalorder %s26, %s40
      %p42 = scmp.eq.s32.totalorder %s21, 0
      %p43 = por %p41, %p42
      %s44 = ssub.s32 %s15, %s22
      %p45 = scmp.eq.s32.totalorder %s44, 0
      %s47 = sadd.s32 %s46, 1
      %s48 = scalar_select %p45, %s46, %s47
      %p51 = pneg %p45
      %p52 = scmp.eq.s32.totalorder %s15, 1
      %p53 = por %p51, %p52
      %p54 = scmp.ne.s32.totalorder %s46, %s49
      %p55 = scmp.eq.s32.totalorder %s15, 0
      %p56 = por %p54, %p55
      %p57 = scmp.ne.s32.totalorder %s46, %s49
      %p58 = scmp.eq.s32.totalorder %s20, 1
      %p59 = por %p57, %p58
      %p60 = scmp.ne.s32.totalorder %s49, %s50
      %p61 = scmp.eq.s32.totalorder %s20, 0
      %p62 = por %p60, %p61
      %p63 = scmp.ne.s32.totalorder %s49, %s50
      %p64 = scmp.eq.s32.totalorder %s21, 1
      %p65 = por %p63, %p64
      %p67 = scmp.ne.s32.totalorder %s50, %s66
      %p68 = scmp.eq.s32.totalorder %s21, 0
      %p69 = por %p67, %p68
      %s70 = ssub.s32 %s15, %s22
      %p71 = scmp.eq.s32.totalorder %s70, 0
      %s73 = sadd.s32 %s72, 1
      %s74 = scalar_select %p71, %s72, %s73
      %p77 = pneg %p71
      %p78 = scmp.eq.s32.totalorder %s15, 1
      %p79 = por %p77, %p78
      %p80 = scmp.ne.s32.totalorder %s72, %s75
      %p81 = scmp.eq.s32.totalorder %s15, 0
      %p82 = por %p80, %p81
      %p83 = scmp.ne.s32.totalorder %s72, %s75
      %p84 = scmp.eq.s32.totalorder %s20, 1
      %p85 = por %p83, %p84
      %p86 = scmp.ne.s32.totalorder %s75, %s76
      %p87 = scmp.eq.s32.totalorder %s20, 0
      %p88 = por %p86, %p87
      %p89 = scmp.ne.s32.totalorder %s75, %s76
      %p90 = scmp.eq.s32.totalorder %s21, 1
      %p91 = por %p89, %p90
      %p93 = scmp.ne.s32.totalorder %s76, %s92
      %p94 = scmp.eq.s32.totalorder %s21, 0
      %p95 = por %p93, %p94
      %p96 = scmp.le.s32.totalorder 1, %s15
      %p97 = scmp.lt.s32.totalorder %s15, 3
      %p98 = pnand %p96, %p97
      %p99 = pneg %p98
      // Predicated region
      $region9: #{tpu_custom_call.1} parent=5 // pred_check
        _
      $region10: #{tpu_custom_call.1} parent=5 // pred_check_branch
        %101 = sbr.rel (%p98) target = $region12
      $region11: #{tpu_custom_call.1} parent=5 // pred_region
        %s102 = ssub.s32 %s15, 1
        // Predicated region
        $region13: #{tpu_custom_call.1} parent=11 // pred_check
          %p103 = pneg %p36
        $region14: #{tpu_custom_call.1} parent=11 // pred_check_branch
          %105 = sbr.rel (%p103) target = $region16
        $region15: #{tpu_custom_call.1} parent=11 // pred_region
          %s107 = ssub.s32 128, 128
          %108 = vsyncadd [#allocation3], %s107
          %s110 = sshll.u32 [#allocation2], 4
          %s111 = int_to_ptr.vmem [resolvable:$true] %s110
          %113 = dma.hbm_to_vmem [thread:$0]  %s0, 128, %s111, [#allocation3]
        $region16: #{tpu_custom_call.1} parent=11 // pred_fallthru
          _
      $region12: #{tpu_custom_call.1} parent=5 // pred_fallthru
        _
      %p114 = scmp.lt.s32.totalorder %s15, 2
      // Predicated region
      $region17: #{tpu_custom_call.1} parent=5 // pred_check
        %p115 = pneg %p114
      $region18: #{tpu_custom_call.1} parent=5 // pred_check_branch
        %117 = sbr.rel (%p115) target = $region20
      $region19: #{tpu_custom_call.1} parent=5 // pred_region
        // Predicated region
        $region21: #{tpu_custom_call.1} parent=19 // pred_check
          %p118 = pneg %p56
        $region22: #{tpu_custom_call.1} parent=19 // pred_check_branch
          %120 = sbr.rel (%p118) target = $region24
        $region23: #{tpu_custom_call.1} parent=19 // pred_region
          %s121 = sand.u32 %s46, 1
          %s122 = scalar_lea.sflag [#allocation6], %s121
          %s123 = sand.u32 %s46, 1
          %s124 = smul.addr %s123, 8
          %s125 = scalar_lea.vmem [#allocation5], %s124
          %s127 = ssub.s32 128, 128
          %128 = vsyncadd %s122, %s127
          %s129 = smul.addr %s15, 128
          %s130 = scalar_lea.hbm %s1, %s129
          %s132 = sshll.u32 %s125, 4
          %s133 = int_to_ptr.vmem [resolvable:$true] %s132
          %135 = dma.hbm_to_vmem [thread:$0]  %s130, 128, %s133, %s122
        $region24: #{tpu_custom_call.1} parent=19 // pred_fallthru
          _
      $region20: #{tpu_custom_call.1} parent=5 // pred_fallthru
        _
      %p136 = scmp.le.s32.totalorder 1, %s15
      %p137 = scmp.lt.s32.totalorder %s15, 3
      %p138 = pnand %p136, %p137
      %p139 = pneg %p138
      // Predicated region
      $region25: #{tpu_custom_call.1} parent=5 // pred_check
        _
      $region26: #{tpu_custom_call.1} parent=5 // pred_check_branch
        %141 = sbr.rel (%p138) target = $region28
      $region27: #{tpu_custom_call.1} parent=5 // pred_region
        %s142 = ssub.s32 %s15, 1
        // Predicated region
        $region29: #{tpu_custom_call.1} parent=27 // pred_check
          %p143 = pneg %p36
        $region30: #{tpu_custom_call.1} parent=27 // pred_check_branch
          %145 = sbr.rel (%p143) target = $region32
        $region31: #{tpu_custom_call.1} parent=27 // pred_region
          %146 = dma.done [#allocation3], 128
        $region32: #{tpu_custom_call.1} parent=27 // pred_fallthru
          _
        %s147 = sand.u32 %s49, 1
        %s148 = scalar_lea.sflag [#allocation6], %s147
        %s149 = sand.u32 %s49, 1
        %s150 = smul.addr %s149, 8
        %s151 = scalar_lea.vmem [#allocation5], %s150
        // Predicated region
        $region33: #{tpu_custom_call.1} parent=27 // pred_check
          %p152 = pneg %p62
        $region34: #{tpu_custom_call.1} parent=27 // pred_check_branch
          %154 = sbr.rel (%p152) target = $region36
        $region35: #{tpu_custom_call.1} parent=27 // pred_region
          %155 = dma.done %s148, 128
        $region36: #{tpu_custom_call.1} parent=27 // pred_fallthru
          _
        %p156 = pneg %p36
        %p157 = pneg %p33
        %s158 = sand.u32 %s49, 1
        %s159 = scalar_lea.sflag [#allocation6], %s158
        %s160 = sand.u32 %s49, 1
        %s161 = smul.addr %s160, 8
        %s162 = scalar_lea.vmem [#allocation5], %s161
        %p163 = pneg %p62
        %p164 = pneg %p59
        %p165 = pneg %p88
        %p166 = pneg %p85
        %s167 = sand.u32 %s75, 1
        %s168 = scalar_lea.sflag [#allocation4], %s167
        %s169 = sand.u32 %s75, 1
        %s170 = smul.addr %s169, 8
        %s171 = scalar_lea.vmem [#allocation7], %s170
        %v172 = vld [vmem:[%s151] sm:$0xff]
        %v173 = vld [vmem:[#allocation2] sm:$0xff]
        %v174 = vadd.f32 %v172, %v173
        %175 = vst [vmem:[%s171] sm:$0xff] %v174
        %s176 = sand.u32 %s75, 1
        %s177 = scalar_lea.sflag [#allocation4], %s176
        %s178 = sand.u32 %s75, 1
        %s179 = smul.addr %s178, 8
        %s180 = scalar_lea.vmem [#allocation7], %s179
        // Predicated region
        $region37: #{tpu_custom_call.1} parent=27 // pred_check
          %p181 = pneg %p85
        $region38: #{tpu_custom_call.1} parent=27 // pred_check_branch
          %183 = sbr.rel (%p181) target = $region40
        $region39: #{tpu_custom_call.1} parent=27 // pred_region
          %s185 = ssub.s32 128, 128
          %186 = vsyncadd %s177, %s185
          %s187 = smul.addr %s20, 128
          %s188 = scalar_lea.hbm %s2, %s187
          %s190 = sshll.u32 %s180, 4
          %s191 = int_to_ptr.vmem [resolvable:$true] %s190
          %193 = dma.vmem_to_hbm [thread:$0]  %s191, 128, %s188, %s177
        $region40: #{tpu_custom_call.1} parent=27 // pred_fallthru
          _
      $region28: #{tpu_custom_call.1} parent=5 // pred_fallthru
        _
      %p194 = scmp.le.s32.totalorder 2, %s15
      // Predicated region
      $region41: #{tpu_custom_call.1} parent=5 // pred_check
        %p195 = pneg %p194
      $region42: #{tpu_custom_call.1} parent=5 // pred_check_branch
        %197 = sbr.rel (%p195) target = $region44
      $region43: #{tpu_custom_call.1} parent=5 // pred_region
        %s198 = ssub.s32 %s15, 2
        // Predicated region
        $region45: #{tpu_custom_call.1} parent=43 // pred_check
          %p199 = pneg %p91
        $region46: #{tpu_custom_call.1} parent=43 // pred_check_branch
          %201 = sbr.rel (%p199) target = $region48
        $region47: #{tpu_custom_call.1} parent=43 // pred_region
          %s202 = sand.u32 %s76, 1
          %s203 = scalar_lea.sflag [#allocation4], %s202
          %s204 = sand.u32 %s76, 1
          %s205 = smul.addr %s204, 8
          %s206 = scalar_lea.vmem [#allocation7], %s205
          %207 = dma.done %s203, 128
        $region48: #{tpu_custom_call.1} parent=43 // pred_fallthru
          _
      $region44: #{tpu_custom_call.1} parent=5 // pred_fallthru
        _
    $region6: #{tpu_custom_call.1} parent=1 // loop_footer
      %s19 = sadd.s32 1, %s15
    $region7: #{tpu_custom_call.1} parent=1 // loop_footer_branch
      %14 = sbr.rel target = $region3
    $region8: #{tpu_custom_call.1} parent=1 // loop_exit
      _
    %208 = vsyncpa [#allocation3], 1
    %s209 = scalar_lea.sflag [#allocation3], 1
    %210 = vsyncpa %s209, 1
    %211 = vsyncpa [#allocation6], 1
    %s212 = scalar_lea.sflag [#allocation6], 1
    %213 = vsyncpa %s212, 1
    %214 = vsyncpa [#allocation4], 1
    %s215 = scalar_lea.sflag [#allocation4], 1
    %216 = vsyncpa %s215, 1

// kernel: neural_network_forward.1
$region0: #{neural_network_forward.1}
  #allocation0 [shape = 'u32[]', space=smem, size = 0x4, offset = 0x4, fixed_abs, tag = 'smem constant byte address 0x4 - core index']
  #allocation1 [shape = 'u32[144,128]{1,0:T(1,128)}', space=vmem, size = 0x12000, scoped, tag = 'internal scratch']
  %s0 = inlined_call_operand.vmem [shape: f32[8,784], index: 0, kind: input, shape index: {}]
  %s1 = inlined_call_operand.hbm [shape: bf16[784,384], index: 1, kind: input, shape index: {}]
  %s2 = inlined_call_operand.vmem [shape: f32[1,384], index: 2, kind: input, shape index: {}]
  %s3 = inlined_call_operand.vmem [shape: bf16[384,256], index: 3, kind: input, shape index: {}]
  %s4 = inlined_call_operand.vmem [shape: f32[1,256], index: 4, kind: input, shape index: {}]
  %s5 = inlined_call_operand.vmem [shape: bf16[256,128], index: 5, kind: input, shape index: {}]
  %s6 = inlined_call_operand.vmem [shape: f32[1,128], index: 6, kind: input, shape index: {}]
  %s7 = inlined_call_operand.hbm [shape: f32[8,128], index: 7, kind: output, shape index: {}]
  %s8 = sld [smem:[#allocation0]]
  $region42: #{neural_network_forward.1} parent=0
    _
  %s10 = ssub.s32 1, %s8
  %s11 = scalar_select 0, %s10, %s8
  $region1: #{neural_network_forward.1} parent=0
    #allocation2 [shape = 'u8[602112]{0}', space=vmem, size = 0x93000, scoped, tag = 'input window, operand 1, single buffered']
    #allocation3 [shape = 's32[1]{0}', space=sflag, size = 0x4, scoped, tag = 'scoped memory for neural_network_forward.1']
    #allocation4 [shape = 's32[1]{0}', space=sflag, size = 0x4, scoped, tag = 'scoped memory for neural_network_forward.1']
    #allocation5 [shape = 'u8[4096]{0}', space=vmem, size = 0x1000, scoped, tag = 'output window, operand 0, single buffered']
    %12 = vsyncpa [#allocation3], 0
    %13 = vsyncpa [#allocation4], 0
    // Predicated region
    $region2: #{neural_network_forward.1} parent=1 // pred_check
      _
    $region3: #{neural_network_forward.1} parent=1 // pred_check_branch
      %15 = sbr.rel (0) target = $region5
    $region4: #{neural_network_forward.1} parent=1 // pred_region
      _
    $region5: #{neural_network_forward.1} parent=1 // pred_fallthru
      _
    // Predicated region
    $region6: #{neural_network_forward.1} parent=1 // pred_check
      _
    $region7: #{neural_network_forward.1} parent=1 // pred_check_branch
      %17 = sbr.rel (0) target = $region9
    $region8: #{neural_network_forward.1} parent=1 // pred_region
      %s19 = ssub.s32 18816, 18816
      %20 = vsyncadd [#allocation3], %s19
      %s21 = sshll.u32 [#allocation2], 4
      %s22 = int_to_ptr.vmem [resolvable:$true] %s21
      %27 = dma.hbm_to_vmem [thread:$0]  %s1, 18816, %s22, [#allocation3], 192, 192, 12
    $region9: #{neural_network_forward.1} parent=1 // pred_fallthru
      _
    // Predicated region
    $region10: #{neural_network_forward.1} parent=1 // pred_check
      _
    $region11: #{neural_network_forward.1} parent=1 // pred_check_branch
      %29 = sbr.rel (0) target = $region13
    $region12: #{neural_network_forward.1} parent=1 // pred_region
      _
    $region13: #{neural_network_forward.1} parent=1 // pred_fallthru
      _
    // Predicated region
    $region14: #{neural_network_forward.1} parent=1 // pred_check
      _
    $region15: #{neural_network_forward.1} parent=1 // pred_check_branch
      %31 = sbr.rel (0) target = $region17
    $region16: #{neural_network_forward.1} parent=1 // pred_region
      _
    $region17: #{neural_network_forward.1} parent=1 // pred_fallthru
      _
    // Predicated region
    $region18: #{neural_network_forward.1} parent=1 // pred_check
      _
    $region19: #{neural_network_forward.1} parent=1 // pred_check_branch
      %33 = sbr.rel (0) target = $region21
    $region20: #{neural_network_forward.1} parent=1 // pred_region
      _
    $region21: #{neural_network_forward.1} parent=1 // pred_fallthru
      _
    // Predicated region
    $region22: #{neural_network_forward.1} parent=1 // pred_check
      _
    $region23: #{neural_network_forward.1} parent=1 // pred_check_branch
      %35 = sbr.rel (0) target = $region25
    $region24: #{neural_network_forward.1} parent=1 // pred_region
      _
    $region25: #{neural_network_forward.1} parent=1 // pred_fallthru
      _
    // Predicated region
    $region26: #{neural_network_forward.1} parent=1 // pred_check
      _
    $region27: #{neural_network_forward.1} parent=1 // pred_check_branch
      %37 = sbr.rel (0) target = $region29
    $region28: #{neural_network_forward.1} parent=1 // pred_region
      _
    $region29: #{neural_network_forward.1} parent=1 // pred_fallthru
      _
    // Predicated region
    $region30: #{neural_network_forward.1} parent=1 // pred_check
      _
    $region31: #{neural_network_forward.1} parent=1 // pred_check_branch
      %39 = sbr.rel (0) target = $region33
    $region32: #{neural_network_forward.1} parent=1 // pred_region
      %40 = dma.done [#allocation3], 18816
    $region33: #{neural_network_forward.1} parent=1 // pred_fallthru
      _
    %v42 = vld [vmem:[%s0] sm:$0xff]
    %v43 = vld [vmem:[%s0 + $0x8] sm:$0xff]
    %v44 = vld [vmem:[%s0 + $0x10] sm:$0xff]
    %v45 = vld [vmem:[%s0 + $0x18] sm:$0xff]
    %v46 = vld [vmem:[%s0 + $0x20] sm:$0xff]
    %v47 = vld [vmem:[%s0 + $0x28] sm:$0xff]
    %v48 = vld [vmem:[%s0 + $0x30] sm:$0xff]
    %v49 = vpack.c.bf16 %v42, %v42
    %v50 = vpack.c.bf16 %v43, %v43
    %v51 = vpack.c.bf16 %v44, %v44
    %v52 = vpack.c.bf16 %v45, %v45
    %v53 = vpack.c.bf16 %v46, %v46
    %v54 = vpack.c.bf16 %v47, %v47
    %v55 = vpack.c.bf16 %v48, %v48
    %v56 = vld [vmem:[#allocation2] sm:$0xff]
    %v57 = vld [vmem:[#allocation2 + $0x8] sm:$0xf]
    %v58 = vld [vmem:[#allocation2 + $0xc] sm:$0xff]
    %v59 = vld [vmem:[#allocation2 + $0x14] sm:$0xf]
    %v60 = vld [vmem:[#allocation2 + $0x18] sm:$0xff]
    %v61 = vld [vmem:[#allocation2 + $0x20] sm:$0xf]
    %v62 = vld [vmem:[#allocation2 + $0x24] sm:$0xff]
    %v63 = vld [vmem:[#allocation2 + $0x2c] sm:$0xf]
    %v64 = vld [vmem:[#allocation2 + $0x30] sm:$0xff]
    %v65 = vld [vmem:[#allocation2 + $0x38] sm:$0xf]
    %v66 = vld [vmem:[#allocation2 + $0x3c] sm:$0xff]
    %v67 = vld [vmem:[#allocation2 + $0x44] sm:$0xf]
    %v68 = vld [vmem:[#allocation2 + $0x48] sm:$0xff]
    %v69 = vld [vmem:[#allocation2 + $0x50] sm:$0xf]
    %v70 = vld [vmem:[#allocation2 + $0x54] sm:$0xff]
    %v71 = vld [vmem:[#allocation2 + $0x5c] sm:$0xf]
    %v72 = vld [vmem:[#allocation2 + $0x60] sm:$0xff]
    %v73 = vld [vmem:[#allocation2 + $0x68] sm:$0xf]
    %v74 = vld [vmem:[#allocation2 + $0x6c] sm:$0xff]
    %v75 = vld [vmem:[#allocation2 + $0x74] sm:$0xf]
    %v76 = vld [vmem:[#allocation2 + $0x78] sm:$0xff]
    %v77 = vld [vmem:[#allocation2 + $0x80] sm:$0xf]
    %v78 = vld [vmem:[#allocation2 + $0x84] sm:$0xff]
    %v79 = vld [vmem:[#allocation2 + $0x8c] sm:$0xf]
    %v80 = vld [vmem:[#allocation2 + $0x90] sm:$0xff]
    %v81 = vld [vmem:[#allocation2 + $0x98] sm:$0xf]
    %v82 = vld [vmem:[#allocation2 + $0x9c] sm:$0xff]
    %v83 = vld [vmem:[#allocation2 + $0xa4] sm:$0xf]
    %v84 = vld [vmem:[#allocation2 + $0xa8] sm:$0xff]
    %v85 = vld [vmem:[#allocation2 + $0xb0] sm:$0xf]
    %v86 = vld [vmem:[#allocation2 + $0xb4] sm:$0xff]
    %v87 = vld [vmem:[#allocation2 + $0xbc] sm:$0xf]
    %v88 = vld [vmem:[#allocation2 + $0xc0] sm:$0xff]
    %v89 = vld [vmem:[#allocation2 + $0xc8] sm:$0xf]
    %v90 = vld [vmem:[#allocation2 + $0xcc] sm:$0xff]
    %v91 = vld [vmem:[#allocation2 + $0xd4] sm:$0xf]
    %v92 = vld [vmem:[#allocation2 + $0xd8] sm:$0xff]
    %v93 = vld [vmem:[#allocation2 + $0xe0] sm:$0xf]
    %v94 = vld [vmem:[#allocation2 + $0xe4] sm:$0xff]
    %v95 = vld [vmem:[#allocation2 + $0xec] sm:$0xf]
    %v96 = vld [vmem:[#allocation2 + $0xf0] sm:$0xff]
    %v97 = vld [vmem:[#allocation2 + $0xf8] sm:$0xf]
    %v98 = vld [vmem:[#allocation2 + $0xfc] sm:$0xff]
    %v99 = vld [vmem:[#allocation2 + $0x104] sm:$0xf]
    %v100 = vld [vmem:[#allocation2 + $0x108] sm:$0xff]
    %v101 = vld [vmem:[#allocation2 + $0x110] sm:$0xf]
    %v102 = vld [vmem:[#allocation2 + $0x114] sm:$0xff]
    %v103 = vld [vmem:[#allocation2 + $0x11c] sm:$0xf]
    %v104 = vld [vmem:[#allocation2 + $0x120] sm:$0xff]
    %v105 = vld [vmem:[#allocation2 + $0x128] sm:$0xf]
    %v106 = vld [vmem:[#allocation2 + $0x12c] sm:$0xff]
    %v107 = vld [vmem:[#allocation2 + $0x134] sm:$0xf]
    %v108 = vld [vmem:[#allocation2 + $0x138] sm:$0xff]
    %v109 = vld [vmem:[#allocation2 + $0x140] sm:$0xf]
    %v110 = vld [vmem:[#allocation2 + $0x144] sm:$0xff]
    %v111 = vld [vmem:[#allocation2 + $0x14c] sm:$0xf]
    %v112 = vld [vmem:[#allocation2 + $0x150] sm:$0xff]
    %v113 = vld [vmem:[#allocation2 + $0x158] sm:$0xf]
    %v114 = vld [vmem:[#allocation2 + $0x15c] sm:$0xff]
    %v115 = vld [vmem:[#allocation2 + $0x164] sm:$0xf]
    %v116 = vld [vmem:[#allocation2 + $0x168] sm:$0xff]
    %v117 = vld [vmem:[#allocation2 + $0x170] sm:$0xf]
    %v118 = vld [vmem:[#allocation2 + $0x174] sm:$0xff]
    %v119 = vld [vmem:[#allocation2 + $0x17c] sm:$0xf]
    %v120 = vld [vmem:[#allocation2 + $0x180] sm:$0xff]
    %v121 = vld [vmem:[#allocation2 + $0x188] sm:$0xf]
    %v122 = vld [vmem:[#allocation2 + $0x18c] sm:$0xff]
    %v123 = vld [vmem:[#allocation2 + $0x194] sm:$0xf]
    %v124 = vld [vmem:[#allocation2 + $0x198] sm:$0xff]
    %v125 = vld [vmem:[#allocation2 + $0x1a0] sm:$0xf]
    %v126 = vld [vmem:[#allocation2 + $0x1a4] sm:$0xff]
    %v127 = vld [vmem:[#allocation2 + $0x1ac] sm:$0xf]
    %v128 = vld [vmem:[#allocation2 + $0x1b0] sm:$0xff]
    %v129 = vld [vmem:[#allocation2 + $0x1b8] sm:$0xf]
    %v130 = vld [vmem:[#allocation2 + $0x1bc] sm:$0xff]
    %v131 = vld [vmem:[#allocation2 + $0x1c4] sm:$0xf]
    %v132 = vld [vmem:[#allocation2 + $0x1c8] sm:$0xff]
    %v133 = vld [vmem:[#allocation2 + $0x1d0] sm:$0xf]
    %v134 = vld [vmem:[#allocation2 + $0x1d4] sm:$0xff]
    %v135 = vld [vmem:[#allocation2 + $0x1dc] sm:$0xf]
    %v136 = vld [vmem:[#allocation2 + $0x1e0] sm:$0xff]
    %v137 = vld [vmem:[#allocation2 + $0x1e8] sm:$0xf]
    %v138 = vld [vmem:[#allocation2 + $0x1ec] sm:$0xff]
    %v139 = vld [vmem:[#allocation2 + $0x1f4] sm:$0xf]
    %v140 = vld [vmem:[#allocation2 + $0x1f8] sm:$0xff]
    %v141 = vld [vmem:[#allocation2 + $0x200] sm:$0xf]
    %v142 = vld [vmem:[#allocation2 + $0x204] sm:$0xff]
    %v143 = vld [vmem:[#allocation2 + $0x20c] sm:$0xf]
    %v144 = vld [vmem:[#allocation2 + $0x210] sm:$0xff]
    %v145 = vld [vmem:[#allocation2 + $0x218] sm:$0xf]
    %v146 = vld [vmem:[#allocation2 + $0x21c] sm:$0xff]
    %v147 = vld [vmem:[#allocation2 + $0x224] sm:$0xf]
    %v148 = vld [vmem:[#allocation2 + $0x228] sm:$0xff]
    %v149 = vld [vmem:[#allocation2 + $0x230] sm:$0xf]
    %v150 = vld [vmem:[#allocation2 + $0x234] sm:$0xff]
    %v151 = vld [vmem:[#allocation2 + $0x23c] sm:$0xf]
    %v152 = vld [vmem:[#allocation2 + $0x240] sm:$0xff]
    %v153 = vld [vmem:[#allocation2 + $0x248] sm:$0xf]
    %v154 = vld [vmem:[#allocation2 + $0x24c] sm:$0xff]
    %v155 = vld [vmem:[#allocation2 + $0x254] sm:$0xf]
    %v156 = vld [vmem:[#allocation2 + $0x258] sm:$0xff]
    %v157 = vld [vmem:[#allocation2 + $0x260] sm:$0xf]
    %v158 = vld [vmem:[#allocation2 + $0x264] sm:$0xff]
    %v159 = vld [vmem:[#allocation2 + $0x26c] sm:$0xf]
    %v160 = vld [vmem:[#allocation2 + $0x270] sm:$0xff]
    %v161 = vld [vmem:[#allocation2 + $0x278] sm:$0xf]
    %v162 = vld [vmem:[#allocation2 + $0x27c] sm:$0xff]
    %v163 = vld [vmem:[#allocation2 + $0x284] sm:$0xf]
    %v164 = vld [vmem:[#allocation2 + $0x288] sm:$0xff]
    %v165 = vld [vmem:[#allocation2 + $0x290] sm:$0xf]
    %v166 = vld [vmem:[#allocation2 + $0x294] sm:$0xff]
    %v167 = vld [vmem:[#allocation2 + $0x29c] sm:$0xf]
    %v168 = vld [vmem:[#allocation2 + $0x2a0] sm:$0xff]
    %v169 = vld [vmem:[#allocation2 + $0x2a8] sm:$0xf]
    %v170 = vld [vmem:[#allocation2 + $0x2ac] sm:$0xff]
    %v171 = vld [vmem:[#allocation2 + $0x2b4] sm:$0xf]
    %v172 = vld [vmem:[#allocation2 + $0x2b8] sm:$0xff]
    %v173 = vld [vmem:[#allocation2 + $0x2c0] sm:$0xf]
    %v174 = vld [vmem:[#allocation2 + $0x2c4] sm:$0xff]
    %v175 = vld [vmem:[#allocation2 + $0x2cc] sm:$0xf]
    %v176 = vld [vmem:[#allocation2 + $0x2d0] sm:$0xff]
    %v177 = vld [vmem:[#allocation2 + $0x2d8] sm:$0xf]
    %v178 = vld [vmem:[#allocation2 + $0x2dc] sm:$0xff]
    %v179 = vld [vmem:[#allocation2 + $0x2e4] sm:$0xf]
    %v180 = vld [vmem:[#allocation2 + $0x2e8] sm:$0xff]
    %v181 = vld [vmem:[#allocation2 + $0x2f0] sm:$0xf]
    %v182 = vld [vmem:[#allocation2 + $0x2f4] sm:$0xff]
    %v183 = vld [vmem:[#allocation2 + $0x2fc] sm:$0xf]
    %v184 = vld [vmem:[#allocation2 + $0x300] sm:$0xff]
    %v185 = vld [vmem:[#allocation2 + $0x308] sm:$0xf]
    %v186 = vld [vmem:[#allocation2 + $0x30c] sm:$0xff]
    %v187 = vld [vmem:[#allocation2 + $0x314] sm:$0xf]
    %v188 = vld [vmem:[#allocation2 + $0x318] sm:$0xff]
    %v189 = vld [vmem:[#allocation2 + $0x320] sm:$0xf]
    %v190 = vld [vmem:[#allocation2 + $0x324] sm:$0xff]
    %v191 = vld [vmem:[#allocation2 + $0x32c] sm:$0xf]
    %v192 = vld [vmem:[#allocation2 + $0x330] sm:$0xff]
    %v193 = vld [vmem:[#allocation2 + $0x338] sm:$0xf]
    %v194 = vld [vmem:[#allocation2 + $0x33c] sm:$0xff]
    %v195 = vld [vmem:[#allocation2 + $0x344] sm:$0xf]
    %v196 = vld [vmem:[#allocation2 + $0x348] sm:$0xff]
    %v197 = vld [vmem:[#allocation2 + $0x350] sm:$0xf]
    %v198 = vld [vmem:[#allocation2 + $0x354] sm:$0xff]
    %v199 = vld [vmem:[#allocation2 + $0x35c] sm:$0xf]
    %v200 = vld [vmem:[#allocation2 + $0x360] sm:$0xff]
    %v201 = vld [vmem:[#allocation2 + $0x368] sm:$0xf]
    %v202 = vld [vmem:[#allocation2 + $0x36c] sm:$0xff]
    %v203 = vld [vmem:[#allocation2 + $0x374] sm:$0xf]
    %v204 = vld [vmem:[#allocation2 + $0x378] sm:$0xff]
    %v205 = vld [vmem:[#allocation2 + $0x380] sm:$0xf]
    %v206 = vld [vmem:[#allocation2 + $0x384] sm:$0xff]
    %v207 = vld [vmem:[#allocation2 + $0x38c] sm:$0xf]
    %v208 = vld [vmem:[#allocation2 + $0x390] sm:$0xff]
    %v209 = vld [vmem:[#allocation2 + $0x398] sm:$0xf]
    %v210 = vld [vmem:[#allocation2 + $0x39c] sm:$0xff]
    %v211 = vld [vmem:[#allocation2 + $0x3a4] sm:$0xf]
    %v212 = vld [vmem:[#allocation2 + $0x3a8] sm:$0xff]
    %v213 = vld [vmem:[#allocation2 + $0x3b0] sm:$0xf]
    %v214 = vld [vmem:[#allocation2 + $0x3b4] sm:$0xff]
    %v215 = vld [vmem:[#allocation2 + $0x3bc] sm:$0xf]
    %v216 = vld [vmem:[#allocation2 + $0x3c0] sm:$0xff]
    %v217 = vld [vmem:[#allocation2 + $0x3c8] sm:$0xf]
    %v218 = vld [vmem:[#allocation2 + $0x3cc] sm:$0xff]
    %v219 = vld [vmem:[#allocation2 + $0x3d4] sm:$0xf]
    %v220 = vld [vmem:[#allocation2 + $0x3d8] sm:$0xff]
    %v221 = vld [vmem:[#allocation2 + $0x3e0] sm:$0xf]
    %v222 = vld [vmem:[#allocation2 + $0x3e4] sm:$0xff]
    %v223 = vld [vmem:[#allocation2 + $0x3ec] sm:$0xf]
    %v224 = vld [vmem:[#allocation2 + $0x3f0] sm:$0xff]
    %v225 = vld [vmem:[#allocation2 + $0x3f8] sm:$0xf]
    %v226 = vld [vmem:[#allocation2 + $0x3fc] sm:$0xff]
    %v227 = vld [vmem:[#allocation2 + $0x404] sm:$0xf]
    %v228 = vld [vmem:[#allocation2 + $0x408] sm:$0xff]
    %v229 = vld [vmem:[#allocation2 + $0x410] sm:$0xf]
    %v230 = vld [vmem:[#allocation2 + $0x414] sm:$0xff]
    %v231 = vld [vmem:[#allocation2 + $0x41c] sm:$0xf]
    %v232 = vld [vmem:[#allocation2 + $0x420] sm:$0xff]
    %v233 = vld [vmem:[#allocation2 + $0x428] sm:$0xf]
    %v234 = vld [vmem:[#allocation2 + $0x42c] sm:$0xff]
    %v235 = vld [vmem:[#allocation2 + $0x434] sm:$0xf]
    %v236 = vld [vmem:[#allocation2 + $0x438] sm:$0xff]
    %v237 = vld [vmem:[#allocation2 + $0x440] sm:$0xf]
    %v238 = vld [vmem:[#allocation2 + $0x444] sm:$0xff]
    %v239 = vld [vmem:[#allocation2 + $0x44c] sm:$0xf]
    %v240 = vld [vmem:[#allocation2 + $0x450] sm:$0xff]
    %v241 = vld [vmem:[#allocation2 + $0x458] sm:$0xf]
    %v242 = vld [vmem:[#allocation2 + $0x45c] sm:$0xff]
    %v243 = vld [vmem:[#allocation2 + $0x464] sm:$0xf]
    %v244 = vld [vmem:[#allocation2 + $0x468] sm:$0xff]
    %v245 = vld [vmem:[#allocation2 + $0x470] sm:$0xf]
    %v246 = vld [vmem:[#allocation2 + $0x474] sm:$0xff]
    %v247 = vld [vmem:[#allocation2 + $0x47c] sm:$0xf]
    %v248 = vld [vmem:[#allocation2 + $0x480] sm:$0xff]
    %v249 = vld [vmem:[#allocation2 + $0x488] sm:$0xf]
    %v250 = vld [vmem:[#allocation2 + $0x48c] sm:$0xff]
    %v251 = vld [vmem:[#allocation2 + $0x494] sm:$0xf]
    %v252 = vld [vmem:[%s2] sm:$0x7]
    %v254 = vlaneseq
    %v255 = vshrl.u32 %v254, 7
    %v256 = vsub.s32 0, %v255
    %v257 = vrot.slane %v252, %v256
    %v258 = vlaneseq
    %v259 = vshrl.u32 %v258, 7
    %v260 = vsub.s32 1, %v259
    %v261 = vrot.slane %v252, %v260
    %v262 = vlaneseq
    %v263 = vshrl.u32 %v262, 7
    %v264 = vsub.s32 2, %v263
    %v265 = vrot.slane %v252, %v264
    %v465 = vunpack.c.l.b16 %v56
    %v466 = vunpack.c.h.b16 %v56
    %v467 = vunpack.c.l.b16 %v57
    %v468 = vunpack.c.l.b16 %v58
    %v469 = vunpack.c.h.b16 %v58
    %v470 = vunpack.c.l.b16 %v59
    %v471 = vunpack.c.l.b16 %v60
    %v472 = vunpack.c.h.b16 %v60
    %v473 = vunpack.c.l.b16 %v61
    %v474 = vunpack.c.l.b16 %v62
    %v475 = vunpack.c.h.b16 %v62
    %v476 = vunpack.c.l.b16 %v63
    %v477 = vunpack.c.l.b16 %v64
    %v478 = vunpack.c.h.b16 %v64
    %v479 = vunpack.c.l.b16 %v65
    %v480 = vunpack.c.l.b16 %v66
    %v481 = vunpack.c.h.b16 %v66
    %v482 = vunpack.c.l.b16 %v67
    %v483 = vunpack.c.l.b16 %v68
    %v484 = vunpack.c.h.b16 %v68
    %v485 = vunpack.c.l.b16 %v69
    %v486 = vunpack.c.l.b16 %v70
    %v487 = vunpack.c.h.b16 %v70
    %v488 = vunpack.c.l.b16 %v71
    %v489 = vunpack.c.l.b16 %v72
    %v490 = vunpack.c.h.b16 %v72
    %v491 = vunpack.c.l.b16 %v73
    %v492 = vunpack.c.l.b16 %v74
    %v493 = vunpack.c.h.b16 %v74
    %v494 = vunpack.c.l.b16 %v75
    %v495 = vunpack.c.l.b16 %v76
    %v496 = vunpack.c.h.b16 %v76
    %v497 = vunpack.c.l.b16 %v77
    %v498 = vunpack.c.l.b16 %v78
    %v499 = vunpack.c.h.b16 %v78
    %v500 = vunpack.c.l.b16 %v79
    %v501 = vunpack.c.l.b16 %v80
    %v502 = vunpack.c.h.b16 %v80
    %v503 = vunpack.c.l.b16 %v81
    %v504 = vunpack.c.l.b16 %v82
    %v505 = vunpack.c.h.b16 %v82
    %v506 = vunpack.c.l.b16 %v83
    %v507 = vunpack.c.l.b16 %v84
    %v508 = vunpack.c.h.b16 %v84
    %v509 = vunpack.c.l.b16 %v85
    %v510 = vunpack.c.l.b16 %v86
    %v511 = vunpack.c.h.b16 %v86
    %v512 = vunpack.c.l.b16 %v87
    %v513 = vunpack.c.l.b16 %v88
    %v514 = vunpack.c.h.b16 %v88
    %v515 = vunpack.c.l.b16 %v89
    %v516 = vunpack.c.l.b16 %v90
    %v517 = vunpack.c.h.b16 %v90
    %v518 = vunpack.c.l.b16 %v91
    %v519 = vunpack.c.l.b16 %v92
    %v520 = vunpack.c.h.b16 %v92
    %v521 = vunpack.c.l.b16 %v93
    %v522 = vunpack.c.l.b16 %v94
    %v523 = vunpack.c.h.b16 %v94
    %v524 = vunpack.c.l.b16 %v95
    %v525 = vunpack.c.l.b16 %v96
    %v526 = vunpack.c.h.b16 %v96
    %v527 = vunpack.c.l.b16 %v97
    %v528 = vunpack.c.l.b16 %v98
    %v529 = vunpack.c.h.b16 %v98
    %v530 = vunpack.c.l.b16 %v99
    %v531 = vunpack.c.l.b16 %v100
    %v532 = vunpack.c.h.b16 %v100
    %v533 = vunpack.c.l.b16 %v101
    %v534 = vunpack.c.l.b16 %v102
    %v535 = vunpack.c.h.b16 %v102
    %v536 = vunpack.c.l.b16 %v103
    %v537 = vunpack.c.l.b16 %v104
    %v538 = vunpack.c.h.b16 %v104
    %v539 = vunpack.c.l.b16 %v105
    %v540 = vunpack.c.l.b16 %v106
    %v541 = vunpack.c.h.b16 %v106
    %v542 = vunpack.c.l.b16 %v107
    %v543 = vunpack.c.l.b16 %v108
    %v544 = vunpack.c.h.b16 %v108
    %v545 = vunpack.c.l.b16 %v109
    %v546 = vunpack.c.l.b16 %v110
    %v547 = vunpack.c.h.b16 %v110
    %v548 = vunpack.c.l.b16 %v111
    %v549 = vunpack.c.l.b16 %v112
    %v550 = vunpack.c.h.b16 %v112
    %v551 = vunpack.c.l.b16 %v113
    %v552 = vunpack.c.l.b16 %v114
    %v553 = vunpack.c.h.b16 %v114
    %v554 = vunpack.c.l.b16 %v115
    %v555 = vunpack.c.l.b16 %v116
    %v556 = vunpack.c.h.b16 %v116
    %v557 = vunpack.c.l.b16 %v117
    %v558 = vunpack.c.l.b16 %v118
    %v559 = vunpack.c.h.b16 %v118
    %v560 = vunpack.c.l.b16 %v119
    %v561 = vunpack.c.l.b16 %v120
    %v562 = vunpack.c.h.b16 %v120
    %v563 = vunpack.c.l.b16 %v121
    %v564 = vunpack.c.l.b16 %v122
    %v565 = vunpack.c.h.b16 %v122
    %v566 = vunpack.c.l.b16 %v123
    %v567 = vunpack.c.l.b16 %v124
    %v568 = vunpack.c.h.b16 %v124
    %v569 = vunpack.c.l.b16 %v125
    %v570 = vunpack.c.l.b16 %v126
    %v571 = vunpack.c.h.b16 %v126
    %v572 = vunpack.c.l.b16 %v127
    %v573 = vunpack.c.l.b16 %v128
    %v574 = vunpack.c.h.b16 %v128
    %v575 = vunpack.c.l.b16 %v129
    %v576 = vunpack.c.l.b16 %v130
    %v577 = vunpack.c.h.b16 %v130
    %v578 = vunpack.c.l.b16 %v131
    %v579 = vunpack.c.l.b16 %v132
    %v580 = vunpack.c.h.b16 %v132
    %v581 = vunpack.c.l.b16 %v133
    %v582 = vunpack.c.l.b16 %v134
    %v583 = vunpack.c.h.b16 %v134
    %v584 = vunpack.c.l.b16 %v135
    %v585 = vunpack.c.l.b16 %v136
    %v586 = vunpack.c.h.b16 %v136
    %v587 = vunpack.c.l.b16 %v137
    %v588 = vunpack.c.l.b16 %v138
    %v589 = vunpack.c.h.b16 %v138
    %v590 = vunpack.c.l.b16 %v139
    %v591 = vunpack.c.l.b16 %v140
    %v592 = vunpack.c.h.b16 %v140
    %v593 = vunpack.c.l.b16 %v141
    %v594 = vunpack.c.l.b16 %v142
    %v595 = vunpack.c.h.b16 %v142
    %v596 = vunpack.c.l.b16 %v143
    %v597 = vunpack.c.l.b16 %v144
    %v598 = vunpack.c.h.b16 %v144
    %v599 = vunpack.c.l.b16 %v145
    %v600 = vunpack.c.l.b16 %v146
    %v601 = vunpack.c.h.b16 %v146
    %v602 = vunpack.c.l.b16 %v147
    %v603 = vunpack.c.l.b16 %v148
    %v604 = vunpack.c.h.b16 %v148
    %v605 = vunpack.c.l.b16 %v149
    %v606 = vunpack.c.l.b16 %v150
    %v607 = vunpack.c.h.b16 %v150
    %v608 = vunpack.c.l.b16 %v151
    %v609 = vunpack.c.l.b16 %v152
    %v610 = vunpack.c.h.b16 %v152
    %v611 = vunpack.c.l.b16 %v153
    %v612 = vunpack.c.l.b16 %v154
    %v613 = vunpack.c.h.b16 %v154
    %v614 = vunpack.c.l.b16 %v155
    %v615 = vunpack.c.l.b16 %v156
    %v616 = vunpack.c.h.b16 %v156
    %v617 = vunpack.c.l.b16 %v157
    %v618 = vunpack.c.l.b16 %v158
    %v619 = vunpack.c.h.b16 %v158
    %v620 = vunpack.c.l.b16 %v159
    %v621 = vunpack.c.l.b16 %v160
    %v622 = vunpack.c.h.b16 %v160
    %v623 = vunpack.c.l.b16 %v161
    %v624 = vunpack.c.l.b16 %v162
    %v625 = vunpack.c.h.b16 %v162
    %v626 = vunpack.c.l.b16 %v163
    %v627 = vunpack.c.l.b16 %v164
    %v628 = vunpack.c.h.b16 %v164
    %v629 = vunpack.c.l.b16 %v165
    %v630 = vunpack.c.l.b16 %v166
    %v631 = vunpack.c.h.b16 %v166
    %v632 = vunpack.c.l.b16 %v167
    %v633 = vunpack.c.l.b16 %v168
    %v634 = vunpack.c.h.b16 %v168
    %v635 = vunpack.c.l.b16 %v169
    %v636 = vunpack.c.l.b16 %v170
    %v637 = vunpack.c.h.b16 %v170
    %v638 = vunpack.c.l.b16 %v171
    %v639 = vunpack.c.l.b16 %v172
    %v640 = vunpack.c.h.b16 %v172
    %v641 = vunpack.c.l.b16 %v173
    %v642 = vunpack.c.l.b16 %v174
    %v643 = vunpack.c.h.b16 %v174
    %v644 = vunpack.c.l.b16 %v175
    %v645 = vunpack.c.l.b16 %v176
    %v646 = vunpack.c.h.b16 %v176
    %v647 = vunpack.c.l.b16 %v177
    %v648 = vunpack.c.l.b16 %v178
    %v649 = vunpack.c.h.b16 %v178
    %v650 = vunpack.c.l.b16 %v179
    %v651 = vunpack.c.l.b16 %v180
    %v652 = vunpack.c.h.b16 %v180
    %v653 = vunpack.c.l.b16 %v181
    %v654 = vunpack.c.l.b16 %v182
    %v655 = vunpack.c.h.b16 %v182
    %v656 = vunpack.c.l.b16 %v183
    %v657 = vunpack.c.l.b16 %v184
    %v658 = vunpack.c.h.b16 %v184
    %v659 = vunpack.c.l.b16 %v185
    %v660 = vunpack.c.l.b16 %v186
    %v661 = vunpack.c.h.b16 %v186
    %v662 = vunpack.c.l.b16 %v187
    %v663 = vunpack.c.l.b16 %v188
    %v664 = vunpack.c.h.b16 %v188
    %v665 = vunpack.c.l.b16 %v189
    %v666 = vunpack.c.l.b16 %v190
    %v667 = vunpack.c.h.b16 %v190
    %v668 = vunpack.c.l.b16 %v191
    %v669 = vunpack.c.l.b16 %v192
    %v670 = vunpack.c.h.b16 %v192
    %v671 = vunpack.c.l.b16 %v193
    %v672 = vunpack.c.l.b16 %v194
    %v673 = vunpack.c.h.b16 %v194
    %v674 = vunpack.c.l.b16 %v195
    %v675 = vunpack.c.l.b16 %v196
    %v676 = vunpack.c.h.b16 %v196
    %v677 = vunpack.c.l.b16 %v197
    %v678 = vunpack.c.l.b16 %v198
    %v679 = vunpack.c.h.b16 %v198
    %v680 = vunpack.c.l.b16 %v199
    %v681 = vunpack.c.l.b16 %v200
    %v682 = vunpack.c.h.b16 %v200
    %v683 = vunpack.c.l.b16 %v201
    %v684 = vunpack.c.l.b16 %v202
    %v685 = vunpack.c.h.b16 %v202
    %v686 = vunpack.c.l.b16 %v203
    %v687 = vunpack.c.l.b16 %v204
    %v688 = vunpack.c.h.b16 %v204
    %v689 = vunpack.c.l.b16 %v205
    %v690 = vunpack.c.l.b16 %v206
    %v691 = vunpack.c.h.b16 %v206
    %v692 = vunpack.c.l.b16 %v207
    %v693 = vunpack.c.l.b16 %v208
    %v694 = vunpack.c.h.b16 %v208
    %v695 = vunpack.c.l.b16 %v209
    %v696 = vunpack.c.l.b16 %v210
    %v697 = vunpack.c.h.b16 %v210
    %v698 = vunpack.c.l.b16 %v211
    %v699 = vunpack.c.l.b16 %v212
    %v700 = vunpack.c.h.b16 %v212
    %v701 = vunpack.c.l.b16 %v213
    %v702 = vunpack.c.l.b16 %v214
    %v703 = vunpack.c.h.b16 %v214
    %v704 = vunpack.c.l.b16 %v215
    %v705 = vunpack.c.l.b16 %v216
    %v706 = vunpack.c.h.b16 %v216
    %v707 = vunpack.c.l.b16 %v217
    %v708 = vunpack.c.l.b16 %v218
    %v709 = vunpack.c.h.b16 %v218
    %v710 = vunpack.c.l.b16 %v219
    %v711 = vunpack.c.l.b16 %v220
    %v712 = vunpack.c.h.b16 %v220
    %v713 = vunpack.c.l.b16 %v221
    %v714 = vunpack.c.l.b16 %v222
    %v715 = vunpack.c.h.b16 %v222
    %v716 = vunpack.c.l.b16 %v223
    %v717 = vunpack.c.l.b16 %v224
    %v718 = vunpack.c.h.b16 %v224
    %v719 = vunpack.c.l.b16 %v225
    %v720 = vunpack.c.l.b16 %v226
    %v721 = vunpack.c.h.b16 %v226
    %v722 = vunpack.c.l.b16 %v227
    %v723 = vunpack.c.l.b16 %v228
    %v724 = vunpack.c.h.b16 %v228
    %v725 = vunpack.c.l.b16 %v229
    %v726 = vunpack.c.l.b16 %v230
    %v727 = vunpack.c.h.b16 %v230
    %v728 = vunpack.c.l.b16 %v231
    %v729 = vunpack.c.l.b16 %v232
    %v730 = vunpack.c.h.b16 %v232
    %v731 = vunpack.c.l.b16 %v233
    %v732 = vunpack.c.l.b16 %v234
    %v733 = vunpack.c.h.b16 %v234
    %v734 = vunpack.c.l.b16 %v235
    %v735 = vunpack.c.l.b16 %v236
    %v736 = vunpack.c.h.b16 %v236
    %v737 = vunpack.c.l.b16 %v237
    %v738 = vunpack.c.l.b16 %v238
    %v739 = vunpack.c.h.b16 %v238
    %v740 = vunpack.c.l.b16 %v239
    %v741 = vunpack.c.l.b16 %v240
    %v742 = vunpack.c.h.b16 %v240
    %v743 = vunpack.c.l.b16 %v241
    %v744 = vunpack.c.l.b16 %v242
    %v745 = vunpack.c.h.b16 %v242
    %v746 = vunpack.c.l.b16 %v243
    %v747 = vunpack.c.l.b16 %v244
    %v748 = vunpack.c.h.b16 %v244
    %v749 = vunpack.c.l.b16 %v245
    %v750 = vunpack.c.l.b16 %v246
    %v751 = vunpack.c.h.b16 %v246
    %v752 = vunpack.c.l.b16 %v247
    %v753 = vunpack.c.l.b16 %v248
    %v754 = vunpack.c.h.b16 %v248
    %v755 = vunpack.c.l.b16 %v249
    %v756 = vunpack.c.l.b16 %v250
    %v757 = vunpack.c.h.b16 %v250
    %v758 = vunpack.c.l.b16 %v251
    %v759 = vpack.c.b16 %v468, %v465
    %v760 = vpack.c.b16 %v469, %v466
    %v761 = vpack.c.b16 %v470, %v467
    %v762 = vpack.c.b16 %v474, %v471
    %v763 = vpack.c.b16 %v475, %v472
    %v764 = vpack.c.b16 %v476, %v473
    %v765 = vpack.c.b16 %v480, %v477
    %v766 = vpack.c.b16 %v481, %v478
    %v767 = vpack.c.b16 %v482, %v479
    %v768 = vpack.c.b16 %v486, %v483
    %v769 = vpack.c.b16 %v487, %v484
    %v770 = vpack.c.b16 %v488, %v485
    %v771 = vpack.c.b16 %v492, %v489
    %v772 = vpack.c.b16 %v493, %v490
    %v773 = vpack.c.b16 %v494, %v491
    %v774 = vpack.c.b16 %v498, %v495
    %v775 = vpack.c.b16 %v499, %v496
    %v776 = vpack.c.b16 %v500, %v497
    %v777 = vpack.c.b16 %v504, %v501
    %v778 = vpack.c.b16 %v505, %v502
    %v779 = vpack.c.b16 %v506, %v503
    %v780 = vpack.c.b16 %v510, %v507
    %v781 = vpack.c.b16 %v511, %v508
    %v782 = vpack.c.b16 %v512, %v509
    %v783 = vpack.c.b16 %v516, %v513
    %v784 = vpack.c.b16 %v517, %v514
    %v785 = vpack.c.b16 %v518, %v515
    %v786 = vpack.c.b16 %v522, %v519
    %v787 = vpack.c.b16 %v523, %v520
    %v788 = vpack.c.b16 %v524, %v521
    %v789 = vpack.c.b16 %v528, %v525
    %v790 = vpack.c.b16 %v529, %v526
    %v791 = vpack.c.b16 %v530, %v527
    %v792 = vpack.c.b16 %v534, %v531
    %v793 = vpack.c.b16 %v535, %v532
    %v794 = vpack.c.b16 %v536, %v533
    %v795 = vpack.c.b16 %v540, %v537
    %v796 = vpack.c.b16 %v541, %v538
    %v797 = vpack.c.b16 %v542, %v539
    %v798 = vpack.c.b16 %v546, %v543
    %v799 = vpack.c.b16 %v547, %v544
    %v800 = vpack.c.b16 %v548, %v545
    %v801 = vpack.c.b16 %v552, %v549
    %v802 = vpack.c.b16 %v553, %v550
    %v803 = vpack.c.b16 %v554, %v551
    %v804 = vpack.c.b16 %v558, %v555
    %v805 = vpack.c.b16 %v559, %v556
    %v806 = vpack.c.b16 %v560, %v557
    %v807 = vpack.c.b16 %v564, %v561
    %v808 = vpack.c.b16 %v565, %v562
    %v809 = vpack.c.b16 %v566, %v563
    %v810 = vpack.c.b16 %v570, %v567
    %v811 = vpack.c.b16 %v571, %v568
    %v812 = vpack.c.b16 %v572, %v569
    %v813 = vpack.c.b16 %v576, %v573
    %v814 = vpack.c.b16 %v577, %v574
    %v815 = vpack.c.b16 %v578, %v575
    %v816 = vpack.c.b16 %v582, %v579
    %v817 = vpack.c.b16 %v583, %v580
    %v818 = vpack.c.b16 %v584, %v581
    %v819 = vpack.c.b16 %v588, %v585
    %v820 = vpack.c.b16 %v589, %v586
    %v821 = vpack.c.b16 %v590, %v587
    %v822 = vpack.c.b16 %v594, %v591
    %v823 = vpack.c.b16 %v595, %v592
    %v824 = vpack.c.b16 %v596, %v593
    %v825 = vpack.c.b16 %v600, %v597
    %v826 = vpack.c.b16 %v601, %v598
    %v827 = vpack.c.b16 %v602, %v599
    %v828 = vpack.c.b16 %v606, %v603
    %v829 = vpack.c.b16 %v607, %v604
    %v830 = vpack.c.b16 %v608, %v605
    %v831 = vpack.c.b16 %v612, %v609
    %v832 = vpack.c.b16 %v613, %v610
    %v833 = vpack.c.b16 %v614, %v611
    %v834 = vpack.c.b16 %v618, %v615
    %v835 = vpack.c.b16 %v619, %v616
    %v836 = vpack.c.b16 %v620, %v617
    %v837 = vpack.c.b16 %v624, %v621
    %v838 = vpack.c.b16 %v625, %v622
    %v839 = vpack.c.b16 %v626, %v623
    %v840 = vpack.c.b16 %v630, %v627
    %v841 = vpack.c.b16 %v631, %v628
    %v842 = vpack.c.b16 %v632, %v629
    %v843 = vpack.c.b16 %v636, %v633
    %v844 = vpack.c.b16 %v637, %v634
    %v845 = vpack.c.b16 %v638, %v635
    %v846 = vpack.c.b16 %v642, %v639
    %v847 = vpack.c.b16 %v643, %v640
    %v848 = vpack.c.b16 %v644, %v641
    %v849 = vpack.c.b16 %v648, %v645
    %v850 = vpack.c.b16 %v649, %v646
    %v851 = vpack.c.b16 %v650, %v647
    %v852 = vpack.c.b16 %v654, %v651
    %v853 = vpack.c.b16 %v655, %v652
    %v854 = vpack.c.b16 %v656, %v653
    %v855 = vpack.c.b16 %v660, %v657
    %v856 = vpack.c.b16 %v661, %v658
    %v857 = vpack.c.b16 %v662, %v659
    %v858 = vpack.c.b16 %v666, %v663
    %v859 = vpack.c.b16 %v667, %v664
    %v860 = vpack.c.b16 %v668, %v665
    %v861 = vpack.c.b16 %v672, %v669
    %v862 = vpack.c.b16 %v673, %v670
    %v863 = vpack.c.b16 %v674, %v671
    %v864 = vpack.c.b16 %v678, %v675
    %v865 = vpack.c.b16 %v679, %v676
    %v866 = vpack.c.b16 %v680, %v677
    %v867 = vpack.c.b16 %v684, %v681
    %v868 = vpack.c.b16 %v685, %v682
    %v869 = vpack.c.b16 %v686, %v683
    %v870 = vpack.c.b16 %v690, %v687
    %v871 = vpack.c.b16 %v691, %v688
    %v872 = vpack.c.b16 %v692, %v689
    %v873 = vpack.c.b16 %v696, %v693
    %v874 = vpack.c.b16 %v697, %v694
    %v875 = vpack.c.b16 %v698, %v695
    %v876 = vpack.c.b16 %v702, %v699
    %v877 = vpack.c.b16 %v703, %v700
    %v878 = vpack.c.b16 %v704, %v701
    %v879 = vpack.c.b16 %v708, %v705
    %v880 = vpack.c.b16 %v709, %v706
    %v881 = vpack.c.b16 %v710, %v707
    %v882 = vpack.c.b16 %v714, %v711
    %v883 = vpack.c.b16 %v715, %v712
    %v884 = vpack.c.b16 %v716, %v713
    %v885 = vpack.c.b16 %v720, %v717
    %v886 = vpack.c.b16 %v721, %v718
    %v887 = vpack.c.b16 %v722, %v719
    %v888 = vpack.c.b16 %v726, %v723
    %v889 = vpack.c.b16 %v727, %v724
    %v890 = vpack.c.b16 %v728, %v725
    %v891 = vpack.c.b16 %v732, %v729
    %v892 = vpack.c.b16 %v733, %v730
    %v893 = vpack.c.b16 %v734, %v731
    %v894 = vpack.c.b16 %v738, %v735
    %v895 = vpack.c.b16 %v739, %v736
    %v896 = vpack.c.b16 %v740, %v737
    %v897 = vpack.c.b16 %v744, %v741
    %v898 = vpack.c.b16 %v745, %v742
    %v899 = vpack.c.b16 %v746, %v743
    %v900 = vpack.c.b16 %v750, %v747
    %v901 = vpack.c.b16 %v751, %v748
    %v902 = vpack.c.b16 %v752, %v749
    %v903 = vpack.c.b16 %v756, %v753
    %v904 = vpack.c.b16 %v757, %v754
    %v905 = vpack.c.b16 %v758, %v755
    %vm1053 = vcmask 130048
    %v1055 = vsel %vm1053, %v55, 0
    %1057 = vmatprep.subr.bf16.mxu0 %v781
    %1058 = vmatpush1.bf16.msra.mxu0 %v780
    %1059 = vmatprep.subr.bf16.mxu0 %v778
    %1060 = vmatpush1.bf16.msra.mxu0 %v777
    %1061 = vmatprep.subr.bf16.mxu0 %v775
    %1062 = vmatpush1.bf16.msra.mxu0 %v774
    %1063 = vmatprep.subr.bf16.mxu0 %v772
    %1064 = vmatpush1.bf16.msra.mxu0 %v771
    %1065 = vmatprep.subr.bf16.mxu0 %v769
    %1066 = vmatpush1.bf16.msra.mxu0 %v768
    %1067 = vmatprep.subr.bf16.mxu0 %v766
    %1068 = vmatpush1.bf16.msra.mxu0 %v765
    %1069 = vmatprep.subr.bf16.mxu0 %v763
    %1070 = vmatpush1.bf16.msra.mxu0 %v762
    %1071 = vmatprep.subr.bf16.mxu0 %v760
    %1072 = vmatpush1.bf16.msra.mxu0 %v759
    %1073 = vmatprep.subr.bf16.mxu0 %v805
    %1074 = vmatpush2.bf16.msra.mxu0 %v804
    %1075 = vmatprep.subr.bf16.mxu0 %v802
    %1076 = vmatpush2.bf16.msra.mxu0 %v801
    %1077 = vmatprep.subr.bf16.mxu0 %v799
    %1078 = vmatpush2.bf16.msra.mxu0 %v798
    %1079 = vmatprep.subr.bf16.mxu0 %v796
    %1080 = vmatpush2.bf16.msra.mxu0 %v795
    %1081 = vmatprep.subr.bf16.mxu0 %v793
    %1082 = vmatpush2.bf16.msra.mxu0 %v792
    %1083 = vmatprep.subr.bf16.mxu0 %v790
    %1084 = vmatpush2.bf16.msra.mxu0 %v789
    %1085 = vmatprep.subr.bf16.mxu0 %v787
    %1086 = vmatpush2.bf16.msra.mxu0 %v786
    %1087 = vmatprep.subr.bf16.mxu0 %v784
    %1088 = vmatpush2.bf16.msra.mxu0 %v783
    %1089 = vmatprep.mubr.bf16.mxu0 %v50
    %1090 = vmatmul.mubr.bf16.gmra.mxu0 %v49
    %v1091 = vpop.f32.mrf.mxu0
    %v1092 = vadd.f32 %v257, %v1091
    %v1093 = vpop.f32.mrf.mxu0
    %v1094 = vadd.f32 %v261, %v1093
    %v1095 = vpop.f32.mrf.mxu0
    %v1096 = vpop.f32.mrf.mxu0
    %1097 = vdwg.mxu0
    %1098 = vmatprep.subr.bf16.mxu0 %v829
    %1099 = vmatpush1.bf16.msra.mxu0 %v828
    %1100 = vmatprep.subr.bf16.mxu0 %v826
    %1101 = vmatpush1.bf16.msra.mxu0 %v825
    %1102 = vmatprep.subr.bf16.mxu0 %v823
    %1103 = vmatpush1.bf16.msra.mxu0 %v822
    %1104 = vmatprep.subr.bf16.mxu0 %v820
    %1105 = vmatpush1.bf16.msra.mxu0 %v819
    %1106 = vmatprep.subr.bf16.mxu0 %v817
    %1107 = vmatpush1.bf16.msra.mxu0 %v816
    %1108 = vmatprep.subr.bf16.mxu0 %v814
    %1109 = vmatpush1.bf16.msra.mxu0 %v813
    %1110 = vmatprep.subr.bf16.mxu0 %v811
    %1111 = vmatpush1.bf16.msra.mxu0 %v810
    %1112 = vmatprep.subr.bf16.mxu0 %v808
    %1113 = vmatpush1.bf16.msra.mxu0 %v807
    %1114 = vmatprep.subr.bf16.mxu0 %v853
    %1115 = vmatpush2.bf16.msra.mxu0 %v852
    %1116 = vmatprep.subr.bf16.mxu0 %v850
    %1117 = vmatpush2.bf16.msra.mxu0 %v849
    %1118 = vmatprep.subr.bf16.mxu0 %v847
    %1119 = vmatpush2.bf16.msra.mxu0 %v846
    %1120 = vmatprep.subr.bf16.mxu0 %v844
    %1121 = vmatpush2.bf16.msra.mxu0 %v843
    %1122 = vmatprep.subr.bf16.mxu0 %v841
    %1123 = vmatpush2.bf16.msra.mxu0 %v840
    %1124 = vmatprep.subr.bf16.mxu0 %v838
    %1125 = vmatpush2.bf16.msra.mxu0 %v837
    %1126 = vmatprep.subr.bf16.mxu0 %v835
    %1127 = vmatpush2.bf16.msra.mxu0 %v834
    %1128 = vmatprep.subr.bf16.mxu0 %v832
    %1129 = vmatpush2.bf16.msra.mxu0 %v831
    %1130 = vmatprep.mubr.bf16.mxu0 %v52
    %1131 = vmatmul.mubr.bf16.gmra.mxu0 %v51
    %v1132 = vpop.f32.mrf.mxu0
    %v1133 = vadd.f32 %v1092, %v1132
    %v1134 = vpop.f32.mrf.mxu0
    %v1135 = vadd.f32 %v1094, %v1134
    %v1136 = vpop.f32.mrf.mxu0
    %v1137 = vpop.f32.mrf.mxu0
    %1138 = vdwg.mxu0
    %1139 = vmatprep.subr.bf16.mxu0 %v877
    %1140 = vmatpush1.bf16.msra.mxu0 %v876
    %1141 = vmatprep.subr.bf16.mxu0 %v874
    %1142 = vmatpush1.bf16.msra.mxu0 %v873
    %1143 = vmatprep.subr.bf16.mxu0 %v871
    %1144 = vmatpush1.bf16.msra.mxu0 %v870
    %1145 = vmatprep.subr.bf16.mxu0 %v868
    %1146 = vmatpush1.bf16.msra.mxu0 %v867
    %1147 = vmatprep.subr.bf16.mxu0 %v865
    %1148 = vmatpush1.bf16.msra.mxu0 %v864
    %1149 = vmatprep.subr.bf16.mxu0 %v862
    %1150 = vmatpush1.bf16.msra.mxu0 %v861
    %1151 = vmatprep.subr.bf16.mxu0 %v859
    %1152 = vmatpush1.bf16.msra.mxu0 %v858
    %1153 = vmatprep.subr.bf16.mxu0 %v856
    %1154 = vmatpush1.bf16.msra.mxu0 %v855
    %1155 = vmatprep.subr.bf16.mxu0 %v901
    %1156 = vmatpush2.bf16.msra.mxu0 %v900
    %1157 = vmatprep.subr.bf16.mxu0 %v898
    %1158 = vmatpush2.bf16.msra.mxu0 %v897
    %1159 = vmatprep.subr.bf16.mxu0 %v895
    %1160 = vmatpush2.bf16.msra.mxu0 %v894
    %1161 = vmatprep.subr.bf16.mxu0 %v892
    %1162 = vmatpush2.bf16.msra.mxu0 %v891
    %1163 = vmatprep.subr.bf16.mxu0 %v889
    %1164 = vmatpush2.bf16.msra.mxu0 %v888
    %1165 = vmatprep.subr.bf16.mxu0 %v886
    %1166 = vmatpush2.bf16.msra.mxu0 %v885
    %1167 = vmatprep.subr.bf16.mxu0 %v883
    %1168 = vmatpush2.bf16.msra.mxu0 %v882
    %1169 = vmatprep.subr.bf16.mxu0 %v880
    %1170 = vmatpush2.bf16.msra.mxu0 %v879
    %1171 = vmatprep.mubr.bf16.mxu0 %v54
    %1172 = vmatmul.mubr.bf16.gmra.mxu0 %v53
    %v1173 = vpop.f32.mrf.mxu0
    %v1174 = vadd.f32 %v1133, %v1173
    %v1175 = vpop.f32.mrf.mxu0
    %v1176 = vadd.f32 %v1135, %v1175
    %v1177 = vpop.f32.mrf.mxu0
    %v1178 = vpop.f32.mrf.mxu0
    %1179 = vdwg.mxu0
    %1180 = vmatprep.subr.bf16.mxu0 0
    %1181 = vmatpush1.bf16.msra.mxu0 0
    %1182 = vmatprep.subr.bf16.mxu0 0
    %1183 = vmatpush1.bf16.msra.mxu0 0
    %1184 = vmatprep.subr.bf16.mxu0 0
    %1185 = vmatpush1.bf16.msra.mxu0 0
    %1186 = vmatprep.subr.bf16.mxu0 0
    %1187 = vmatpush1.bf16.msra.mxu0 0
    %1188 = vmatprep.subr.bf16.mxu0 0
    %1189 = vmatpush1.bf16.msra.mxu0 0
    %1190 = vmatprep.subr.bf16.mxu0 0
    %1191 = vmatpush1.bf16.msra.mxu0 0
    %1192 = vmatprep.subr.bf16.mxu0 0
    %1193 = vmatpush1.bf16.msra.mxu0 0
    %1194 = vmatprep.subr.bf16.mxu0 %v904
    %1195 = vmatpush1.bf16.msra.mxu0 %v903
    %1196 = vmatprep.subr.bf16.mxu0 0
    %1197 = vmatpush2.bf16.msra.mxu0 0
    %1198 = vmatprep.subr.bf16.mxu0 0
    %1199 = vmatpush2.bf16.msra.mxu0 0
    %1200 = vmatprep.subr.bf16.mxu0 0
    %1201 = vmatpush2.bf16.msra.mxu0 0
    %1202 = vmatprep.subr.bf16.mxu0 0
    %1203 = vmatpush2.bf16.msra.mxu0 0
    %1204 = vmatprep.subr.bf16.mxu0 0
    %1205 = vmatpush2.bf16.msra.mxu0 0
    %1206 = vmatprep.subr.bf16.mxu0 0
    %1207 = vmatpush2.bf16.msra.mxu0 0
    %1208 = vmatprep.subr.bf16.mxu0 0
    %1209 = vmatpush2.bf16.msra.mxu0 0
    %1210 = vmatprep.subr.bf16.mxu0 0
    %1211 = vmatpush2.bf16.msra.mxu0 0
    %1212 = vmatprep.mubr.bf16.mxu0 0
    %1213 = vmatmul.mubr.bf16.gmra.mxu0 %v1055
    %v1214 = vpop.f32.mrf.mxu0
    %v1215 = vadd.f32 %v1174, %v1214
    %v1216 = vpop.f32.mrf.mxu0
    %v1217 = vadd.f32 %v1176, %v1216
    %v1218 = vpop.f32.mrf.mxu0
    %v1219 = vpop.f32.mrf.mxu0
    %1220 = vdwg.mxu0
    %1221 = vmatprep.subr.bf16.mxu0 0
    %1222 = vmatpush1.bf16.msra.mxu0 %v782
    %1223 = vmatprep.subr.bf16.mxu0 0
    %1224 = vmatpush1.bf16.msra.mxu0 %v779
    %1225 = vmatprep.subr.bf16.mxu0 0
    %1226 = vmatpush1.bf16.msra.mxu0 %v776
    %1227 = vmatprep.subr.bf16.mxu0 0
    %1228 = vmatpush1.bf16.msra.mxu0 %v773
    %1229 = vmatprep.subr.bf16.mxu0 0
    %1230 = vmatpush1.bf16.msra.mxu0 %v770
    %1231 = vmatprep.subr.bf16.mxu0 0
    %1232 = vmatpush1.bf16.msra.mxu0 %v767
    %1233 = vmatprep.subr.bf16.mxu0 0
    %1234 = vmatpush1.bf16.msra.mxu0 %v764
    %1235 = vmatprep.subr.bf16.mxu0 0
    %1236 = vmatpush1.bf16.msra.mxu0 %v761
    %1237 = vmatprep.subr.bf16.mxu0 0
    %1238 = vmatpush2.bf16.msra.mxu0 %v806
    %1239 = vmatprep.subr.bf16.mxu0 0
    %1240 = vmatpush2.bf16.msra.mxu0 %v803
    %1241 = vmatprep.subr.bf16.mxu0 0
    %1242 = vmatpush2.bf16.msra.mxu0 %v800
    %1243 = vmatprep.subr.bf16.mxu0 0
    %1244 = vmatpush2.bf16.msra.mxu0 %v797
    %1245 = vmatprep.subr.bf16.mxu0 0
    %1246 = vmatpush2.bf16.msra.mxu0 %v794
    %1247 = vmatprep.subr.bf16.mxu0 0
    %1248 = vmatpush2.bf16.msra.mxu0 %v791
    %1249 = vmatprep.subr.bf16.mxu0 0
    %1250 = vmatpush2.bf16.msra.mxu0 %v788
    %1251 = vmatprep.subr.bf16.mxu0 0
    %1252 = vmatpush2.bf16.msra.mxu0 %v785
    %1253 = vmatprep.mubr.bf16.mxu0 %v50
    %1254 = vmatmul.mubr.bf16.gmra.mxu0 %v49
    %v1255 = vpop.f32.mrf.mxu0
    %v1256 = vadd.f32 %v265, %v1255
    %v1257 = vpop.f32.mrf.mxu0
    %v1258 = vpop.f32.mrf.mxu0
    %v1259 = vpop.f32.mrf.mxu0
    %1260 = vdwg.mxu0
    %1261 = vmatprep.subr.bf16.mxu0 0
    %1262 = vmatpush1.bf16.msra.mxu0 %v830
    %1263 = vmatprep.subr.bf16.mxu0 0
    %1264 = vmatpush1.bf16.msra.mxu0 %v827
    %1265 = vmatprep.subr.bf16.mxu0 0
    %1266 = vmatpush1.bf16.msra.mxu0 %v824
    %1267 = vmatprep.subr.bf16.mxu0 0
    %1268 = vmatpush1.bf16.msra.mxu0 %v821
    %1269 = vmatprep.subr.bf16.mxu0 0
    %1270 = vmatpush1.bf16.msra.mxu0 %v818
    %1271 = vmatprep.subr.bf16.mxu0 0
    %1272 = vmatpush1.bf16.msra.mxu0 %v815
    %1273 = vmatprep.subr.bf16.mxu0 0
    %1274 = vmatpush1.bf16.msra.mxu0 %v812
    %1275 = vmatprep.subr.bf16.mxu0 0
    %1276 = vmatpush1.bf16.msra.mxu0 %v809
    %1277 = vmatprep.subr.bf16.mxu0 0
    %1278 = vmatpush2.bf16.msra.mxu0 %v854
    %1279 = vmatprep.subr.bf16.mxu0 0
    %1280 = vmatpush2.bf16.msra.mxu0 %v851
    %1281 = vmatprep.subr.bf16.mxu0 0
    %1282 = vmatpush2.bf16.msra.mxu0 %v848
    %1283 = vmatprep.subr.bf16.mxu0 0
    %1284 = vmatpush2.bf16.msra.mxu0 %v845
    %1285 = vmatprep.subr.bf16.mxu0 0
    %1286 = vmatpush2.bf16.msra.mxu0 %v842
    %1287 = vmatprep.subr.bf16.mxu0 0
    %1288 = vmatpush2.bf16.msra.mxu0 %v839
    %1289 = vmatprep.subr.bf16.mxu0 0
    %1290 = vmatpush2.bf16.msra.mxu0 %v836
    %1291 = vmatprep.subr.bf16.mxu0 0
    %1292 = vmatpush2.bf16.msra.mxu0 %v833
    %1293 = vmatprep.mubr.bf16.mxu0 %v52
    %1294 = vmatmul.mubr.bf16.gmra.mxu0 %v51
    %v1295 = vpop.f32.mrf.mxu0
    %v1296 = vadd.f32 %v1256, %v1295
    %v1297 = vpop.f32.mrf.mxu0
    %v1298 = vpop.f32.mrf.mxu0
    %v1299 = vpop.f32.mrf.mxu0
    %1300 = vdwg.mxu0
    %1301 = vmatprep.subr.bf16.mxu0 0
    %1302 = vmatpush1.bf16.msra.mxu0 %v878
    %1303 = vmatprep.subr.bf16.mxu0 0
    %1304 = vmatpush1.bf16.msra.mxu0 %v875
    %1305 = vmatprep.subr.bf16.mxu0 0
    %1306 = vmatpush1.bf16.msra.mxu0 %v872
    %1307 = vmatprep.subr.bf16.mxu0 0
    %1308 = vmatpush1.bf16.msra.mxu0 %v869
    %1309 = vmatprep.subr.bf16.mxu0 0
    %1310 = vmatpush1.bf16.msra.mxu0 %v866
    %1311 = vmatprep.subr.bf16.mxu0 0
    %1312 = vmatpush1.bf16.msra.mxu0 %v863
    %1313 = vmatprep.subr.bf16.mxu0 0
    %1314 = vmatpush1.bf16.msra.mxu0 %v860
    %1315 = vmatprep.subr.bf16.mxu0 0
    %1316 = vmatpush1.bf16.msra.mxu0 %v857
    %1317 = vmatprep.subr.bf16.mxu0 0
    %1318 = vmatpush2.bf16.msra.mxu0 %v902
    %1319 = vmatprep.subr.bf16.mxu0 0
    %1320 = vmatpush2.bf16.msra.mxu0 %v899
    %1321 = vmatprep.subr.bf16.mxu0 0
    %1322 = vmatpush2.bf16.msra.mxu0 %v896
    %1323 = vmatprep.subr.bf16.mxu0 0
    %1324 = vmatpush2.bf16.msra.mxu0 %v893
    %1325 = vmatprep.subr.bf16.mxu0 0
    %1326 = vmatpush2.bf16.msra.mxu0 %v890
    %1327 = vmatprep.subr.bf16.mxu0 0
    %1328 = vmatpush2.bf16.msra.mxu0 %v887
    %1329 = vmatprep.subr.bf16.mxu0 0
    %1330 = vmatpush2.bf16.msra.mxu0 %v884
    %1331 = vmatprep.subr.bf16.mxu0 0
    %1332 = vmatpush2.bf16.msra.mxu0 %v881
    %1333 = vmatprep.mubr.bf16.mxu0 %v54
    %1334 = vmatmul.mubr.bf16.gmra.mxu0 %v53
    %v1335 = vpop.f32.mrf.mxu0
    %v1336 = vadd.f32 %v1296, %v1335
    %v1337 = vpop.f32.mrf.mxu0
    %v1338 = vpop.f32.mrf.mxu0
    %v1339 = vpop.f32.mrf.mxu0
    %1340 = vdwg.mxu0
    %1341 = vmatprep.subr.bf16.mxu0 0
    %1342 = vmatpush1.bf16.msra.mxu0 0
    %1343 = vmatprep.subr.bf16.mxu0 0
    %1344 = vmatpush1.bf16.msra.mxu0 0
    %1345 = vmatprep.subr.bf16.mxu0 0
    %1346 = vmatpush1.bf16.msra.mxu0 0
    %1347 = vmatprep.subr.bf16.mxu0 0
    %1348 = vmatpush1.bf16.msra.mxu0 0
    %1349 = vmatprep.subr.bf16.mxu0 0
    %1350 = vmatpush1.bf16.msra.mxu0 0
    %1351 = vmatprep.subr.bf16.mxu0 0
    %1352 = vmatpush1.bf16.msra.mxu0 0
    %1353 = vmatprep.subr.bf16.mxu0 0
    %1354 = vmatpush1.bf16.msra.mxu0 0
    %1355 = vmatprep.subr.bf16.mxu0 0
    %1356 = vmatpush1.bf16.msra.mxu0 %v905
    %1357 = vmatprep.subr.bf16.mxu0 0
    %1358 = vmatpush2.bf16.msra.mxu0 0
    %1359 = vmatprep.subr.bf16.mxu0 0
    %1360 = vmatpush2.bf16.msra.mxu0 0
    %1361 = vmatprep.subr.bf16.mxu0 0
    %1362 = vmatpush2.bf16.msra.mxu0 0
    %1363 = vmatprep.subr.bf16.mxu0 0
    %1364 = vmatpush2.bf16.msra.mxu0 0
    %1365 = vmatprep.subr.bf16.mxu0 0
    %1366 = vmatpush2.bf16.msra.mxu0 0
    %1367 = vmatprep.subr.bf16.mxu0 0
    %1368 = vmatpush2.bf16.msra.mxu0 0
    %1369 = vmatprep.subr.bf16.mxu0 0
    %1370 = vmatpush2.bf16.msra.mxu0 0
    %1371 = vmatprep.subr.bf16.mxu0 0
    %1372 = vmatpush2.bf16.msra.mxu0 0
    %1373 = vmatprep.mubr.bf16.mxu0 0
    %1374 = vmatmul.mubr.bf16.gmra.mxu0 %v1055
    %v1375 = vpop.f32.mrf.mxu0
    %v1376 = vadd.f32 %v1336, %v1375
    %v1377 = vpop.f32.mrf.mxu0
    %v1378 = vpop.f32.mrf.mxu0
    %v1379 = vpop.f32.mrf.mxu0
    %1380 = vdwg.mxu0
    %v1381 = vmax.f32 %v1215, 0.0
    %v1382 = vmax.f32 %v1217, 0.0
    %v1383 = vmax.f32 %v1376, 0.0
    %v1384 = vpack.c.bf16 %v1381, %v1381
    %v1385 = vpack.c.bf16 %v1382, %v1382
    %v1386 = vpack.c.bf16 %v1383, %v1383
    %v1387 = vld [vmem:[%s3] sm:$0xff]
    %v1388 = vld [vmem:[%s3 + $0x8] sm:$0xff]
    %v1389 = vld [vmem:[%s3 + $0x10] sm:$0xff]
    %v1390 = vld [vmem:[%s3 + $0x18] sm:$0xff]
    %v1391 = vld [vmem:[%s3 + $0x20] sm:$0xff]
    %v1392 = vld [vmem:[%s3 + $0x28] sm:$0xff]
    %v1393 = vld [vmem:[%s3 + $0x30] sm:$0xff]
    %v1394 = vld [vmem:[%s3 + $0x38] sm:$0xff]
    %v1395 = vld [vmem:[%s3 + $0x40] sm:$0xff]
    %v1396 = vld [vmem:[%s3 + $0x48] sm:$0xff]
    %v1397 = vld [vmem:[%s3 + $0x50] sm:$0xff]
    %v1398 = vld [vmem:[%s3 + $0x58] sm:$0xff]
    %v1399 = vld [vmem:[%s3 + $0x60] sm:$0xff]
    %v1400 = vld [vmem:[%s3 + $0x68] sm:$0xff]
    %v1401 = vld [vmem:[%s3 + $0x70] sm:$0xff]
    %v1402 = vld [vmem:[%s3 + $0x78] sm:$0xff]
    %v1403 = vld [vmem:[%s3 + $0x80] sm:$0xff]
    %v1404 = vld [vmem:[%s3 + $0x88] sm:$0xff]
    %v1405 = vld [vmem:[%s3 + $0x90] sm:$0xff]
    %v1406 = vld [vmem:[%s3 + $0x98] sm:$0xff]
    %v1407 = vld [vmem:[%s3 + $0xa0] sm:$0xff]
    %v1408 = vld [vmem:[%s3 + $0xa8] sm:$0xff]
    %v1409 = vld [vmem:[%s3 + $0xb0] sm:$0xff]
    %v1410 = vld [vmem:[%s3 + $0xb8] sm:$0xff]
    %v1411 = vld [vmem:[%s3 + $0xc0] sm:$0xff]
    %v1412 = vld [vmem:[%s3 + $0xc8] sm:$0xff]
    %v1413 = vld [vmem:[%s3 + $0xd0] sm:$0xff]
    %v1414 = vld [vmem:[%s3 + $0xd8] sm:$0xff]
    %v1415 = vld [vmem:[%s3 + $0xe0] sm:$0xff]
    %v1416 = vld [vmem:[%s3 + $0xe8] sm:$0xff]
    %v1417 = vld [vmem:[%s3 + $0xf0] sm:$0xff]
    %v1418 = vld [vmem:[%s3 + $0xf8] sm:$0xff]
    %v1419 = vld [vmem:[%s3 + $0x100] sm:$0xff]
    %v1420 = vld [vmem:[%s3 + $0x108] sm:$0xff]
    %v1421 = vld [vmem:[%s3 + $0x110] sm:$0xff]
    %v1422 = vld [vmem:[%s3 + $0x118] sm:$0xff]
    %v1423 = vld [vmem:[%s3 + $0x120] sm:$0xff]
    %v1424 = vld [vmem:[%s3 + $0x128] sm:$0xff]
    %v1425 = vld [vmem:[%s3 + $0x130] sm:$0xff]
    %v1426 = vld [vmem:[%s3 + $0x138] sm:$0xff]
    %v1427 = vld [vmem:[%s3 + $0x140] sm:$0xff]
    %v1428 = vld [vmem:[%s3 + $0x148] sm:$0xff]
    %v1429 = vld [vmem:[%s3 + $0x150] sm:$0xff]
    %v1430 = vld [vmem:[%s3 + $0x158] sm:$0xff]
    %v1431 = vld [vmem:[%s3 + $0x160] sm:$0xff]
    %v1432 = vld [vmem:[%s3 + $0x168] sm:$0xff]
    %v1433 = vld [vmem:[%s3 + $0x170] sm:$0xff]
    %v1434 = vld [vmem:[%s3 + $0x178] sm:$0xff]
    %v1435 = vld [vmem:[%s4] sm:$0x3]
    %v1437 = vlaneseq
    %v1438 = vshrl.u32 %v1437, 7
    %v1439 = vsub.s32 0, %v1438
    %v1440 = vrot.slane %v1435, %v1439
    %v1441 = vlaneseq
    %v1442 = vshrl.u32 %v1441, 7
    %v1443 = vsub.s32 1, %v1442
    %v1444 = vrot.slane %v1435, %v1443
    %v1495 = vunpack.c.l.b16 %v1387
    %v1496 = vunpack.c.h.b16 %v1387
    %v1497 = vunpack.c.l.b16 %v1388
    %v1498 = vunpack.c.h.b16 %v1388
    %v1499 = vunpack.c.l.b16 %v1389
    %v1500 = vunpack.c.h.b16 %v1389
    %v1501 = vunpack.c.l.b16 %v1390
    %v1502 = vunpack.c.h.b16 %v1390
    %v1503 = vunpack.c.l.b16 %v1391
    %v1504 = vunpack.c.h.b16 %v1391
    %v1505 = vunpack.c.l.b16 %v1392
    %v1506 = vunpack.c.h.b16 %v1392
    %v1507 = vunpack.c.l.b16 %v1393
    %v1508 = vunpack.c.h.b16 %v1393
    %v1509 = vunpack.c.l.b16 %v1394
    %v1510 = vunpack.c.h.b16 %v1394
    %v1511 = vunpack.c.l.b16 %v1395
    %v1512 = vunpack.c.h.b16 %v1395
    %v1513 = vunpack.c.l.b16 %v1396
    %v1514 = vunpack.c.h.b16 %v1396
    %v1515 = vunpack.c.l.b16 %v1397
    %v1516 = vunpack.c.h.b16 %v1397
    %v1517 = vunpack.c.l.b16 %v1398
    %v1518 = vunpack.c.h.b16 %v1398
    %v1519 = vunpack.c.l.b16 %v1399
    %v1520 = vunpack.c.h.b16 %v1399
    %v1521 = vunpack.c.l.b16 %v1400
    %v1522 = vunpack.c.h.b16 %v1400
    %v1523 = vunpack.c.l.b16 %v1401
    %v1524 = vunpack.c.h.b16 %v1401
    %v1525 = vunpack.c.l.b16 %v1402
    %v1526 = vunpack.c.h.b16 %v1402
    %v1527 = vunpack.c.l.b16 %v1403
    %v1528 = vunpack.c.h.b16 %v1403
    %v1529 = vunpack.c.l.b16 %v1404
    %v1530 = vunpack.c.h.b16 %v1404
    %v1531 = vunpack.c.l.b16 %v1405
    %v1532 = vunpack.c.h.b16 %v1405
    %v1533 = vunpack.c.l.b16 %v1406
    %v1534 = vunpack.c.h.b16 %v1406
    %v1535 = vunpack.c.l.b16 %v1407
    %v1536 = vunpack.c.h.b16 %v1407
    %v1537 = vunpack.c.l.b16 %v1408
    %v1538 = vunpack.c.h.b16 %v1408
    %v1539 = vunpack.c.l.b16 %v1409
    %v1540 = vunpack.c.h.b16 %v1409
    %v1541 = vunpack.c.l.b16 %v1410
    %v1542 = vunpack.c.h.b16 %v1410
    %v1543 = vunpack.c.l.b16 %v1411
    %v1544 = vunpack.c.h.b16 %v1411
    %v1545 = vunpack.c.l.b16 %v1412
    %v1546 = vunpack.c.h.b16 %v1412
    %v1547 = vunpack.c.l.b16 %v1413
    %v1548 = vunpack.c.h.b16 %v1413
    %v1549 = vunpack.c.l.b16 %v1414
    %v1550 = vunpack.c.h.b16 %v1414
    %v1551 = vunpack.c.l.b16 %v1415
    %v1552 = vunpack.c.h.b16 %v1415
    %v1553 = vunpack.c.l.b16 %v1416
    %v1554 = vunpack.c.h.b16 %v1416
    %v1555 = vunpack.c.l.b16 %v1417
    %v1556 = vunpack.c.h.b16 %v1417
    %v1557 = vunpack.c.l.b16 %v1418
    %v1558 = vunpack.c.h.b16 %v1418
    %v1559 = vunpack.c.l.b16 %v1419
    %v1560 = vunpack.c.h.b16 %v1419
    %v1561 = vunpack.c.l.b16 %v1420
    %v1562 = vunpack.c.h.b16 %v1420
    %v1563 = vunpack.c.l.b16 %v1421
    %v1564 = vunpack.c.h.b16 %v1421
    %v1565 = vunpack.c.l.b16 %v1422
    %v1566 = vunpack.c.h.b16 %v1422
    %v1567 = vunpack.c.l.b16 %v1423
    %v1568 = vunpack.c.h.b16 %v1423
    %v1569 = vunpack.c.l.b16 %v1424
    %v1570 = vunpack.c.h.b16 %v1424
    %v1571 = vunpack.c.l.b16 %v1425
    %v1572 = vunpack.c.h.b16 %v1425
    %v1573 = vunpack.c.l.b16 %v1426
    %v1574 = vunpack.c.h.b16 %v1426
    %v1575 = vunpack.c.l.b16 %v1427
    %v1576 = vunpack.c.h.b16 %v1427
    %v1577 = vunpack.c.l.b16 %v1428
    %v1578 = vunpack.c.h.b16 %v1428
    %v1579 = vunpack.c.l.b16 %v1429
    %v1580 = vunpack.c.h.b16 %v1429
    %v1581 = vunpack.c.l.b16 %v1430
    %v1582 = vunpack.c.h.b16 %v1430
    %v1583 = vunpack.c.l.b16 %v1431
    %v1584 = vunpack.c.h.b16 %v1431
    %v1585 = vunpack.c.l.b16 %v1432
    %v1586 = vunpack.c.h.b16 %v1432
    %v1587 = vunpack.c.l.b16 %v1433
    %v1588 = vunpack.c.h.b16 %v1433
    %v1589 = vunpack.c.l.b16 %v1434
    %v1590 = vunpack.c.h.b16 %v1434
    %v1591 = vpack.c.b16 %v1497, %v1495
    %v1592 = vpack.c.b16 %v1498, %v1496
    %v1593 = vpack.c.b16 %v1501, %v1499
    %v1594 = vpack.c.b16 %v1502, %v1500
    %v1595 = vpack.c.b16 %v1505, %v1503
    %v1596 = vpack.c.b16 %v1506, %v1504
    %v1597 = vpack.c.b16 %v1509, %v1507
    %v1598 = vpack.c.b16 %v1510, %v1508
    %v1599 = vpack.c.b16 %v1513, %v1511
    %v1600 = vpack.c.b16 %v1514, %v1512
    %v1601 = vpack.c.b16 %v1517, %v1515
    %v1602 = vpack.c.b16 %v1518, %v1516
    %v1603 = vpack.c.b16 %v1521, %v1519
    %v1604 = vpack.c.b16 %v1522, %v1520
    %v1605 = vpack.c.b16 %v1525, %v1523
    %v1606 = vpack.c.b16 %v1526, %v1524
    %v1607 = vpack.c.b16 %v1529, %v1527
    %v1608 = vpack.c.b16 %v1530, %v1528
    %v1609 = vpack.c.b16 %v1533, %v1531
    %v1610 = vpack.c.b16 %v1534, %v1532
    %v1611 = vpack.c.b16 %v1537, %v1535
    %v1612 = vpack.c.b16 %v1538, %v1536
    %v1613 = vpack.c.b16 %v1541, %v1539
    %v1614 = vpack.c.b16 %v1542, %v1540
    %v1615 = vpack.c.b16 %v1545, %v1543
    %v1616 = vpack.c.b16 %v1546, %v1544
    %v1617 = vpack.c.b16 %v1549, %v1547
    %v1618 = vpack.c.b16 %v1550, %v1548
    %v1619 = vpack.c.b16 %v1553, %v1551
    %v1620 = vpack.c.b16 %v1554, %v1552
    %v1621 = vpack.c.b16 %v1557, %v1555
    %v1622 = vpack.c.b16 %v1558, %v1556
    %v1623 = vpack.c.b16 %v1561, %v1559
    %v1624 = vpack.c.b16 %v1562, %v1560
    %v1625 = vpack.c.b16 %v1565, %v1563
    %v1626 = vpack.c.b16 %v1566, %v1564
    %v1627 = vpack.c.b16 %v1569, %v1567
    %v1628 = vpack.c.b16 %v1570, %v1568
    %v1629 = vpack.c.b16 %v1573, %v1571
    %v1630 = vpack.c.b16 %v1574, %v1572
    %v1631 = vpack.c.b16 %v1577, %v1575
    %v1632 = vpack.c.b16 %v1578, %v1576
    %v1633 = vpack.c.b16 %v1581, %v1579
    %v1634 = vpack.c.b16 %v1582, %v1580
    %v1635 = vpack.c.b16 %v1585, %v1583
    %v1636 = vpack.c.b16 %v1586, %v1584
    %v1637 = vpack.c.b16 %v1589, %v1587
    %v1638 = vpack.c.b16 %v1590, %v1588
    %1687 = vmatprep.subr.bf16.mxu0 %v1606
    %1688 = vmatpush1.bf16.msra.mxu0 %v1605
    %1689 = vmatprep.subr.bf16.mxu0 %v1604
    %1690 = vmatpush1.bf16.msra.mxu0 %v1603
    %1691 = vmatprep.subr.bf16.mxu0 %v1602
    %1692 = vmatpush1.bf16.msra.mxu0 %v1601
    %1693 = vmatprep.subr.bf16.mxu0 %v1600
    %1694 = vmatpush1.bf16.msra.mxu0 %v1599
    %1695 = vmatprep.subr.bf16.mxu0 %v1598
    %1696 = vmatpush1.bf16.msra.mxu0 %v1597
    %1697 = vmatprep.subr.bf16.mxu0 %v1596
    %1698 = vmatpush1.bf16.msra.mxu0 %v1595
    %1699 = vmatprep.subr.bf16.mxu0 %v1594
    %1700 = vmatpush1.bf16.msra.mxu0 %v1593
    %1701 = vmatprep.subr.bf16.mxu0 %v1592
    %1702 = vmatpush1.bf16.msra.mxu0 %v1591
    %1703 = vmatprep.subr.bf16.mxu0 %v1622
    %1704 = vmatpush2.bf16.msra.mxu0 %v1621
    %1705 = vmatprep.subr.bf16.mxu0 %v1620
    %1706 = vmatpush2.bf16.msra.mxu0 %v1619
    %1707 = vmatprep.subr.bf16.mxu0 %v1618
    %1708 = vmatpush2.bf16.msra.mxu0 %v1617
    %1709 = vmatprep.subr.bf16.mxu0 %v1616
    %1710 = vmatpush2.bf16.msra.mxu0 %v1615
    %1711 = vmatprep.subr.bf16.mxu0 %v1614
    %1712 = vmatpush2.bf16.msra.mxu0 %v1613
    %1713 = vmatprep.subr.bf16.mxu0 %v1612
    %1714 = vmatpush2.bf16.msra.mxu0 %v1611
    %1715 = vmatprep.subr.bf16.mxu0 %v1610
    %1716 = vmatpush2.bf16.msra.mxu0 %v1609
    %1717 = vmatprep.subr.bf16.mxu0 %v1608
    %1718 = vmatpush2.bf16.msra.mxu0 %v1607
    %1719 = vmatprep.mubr.bf16.mxu0 %v1385
    %1720 = vmatmul.mubr.bf16.gmra.mxu0 %v1384
    %v1721 = vpop.f32.mrf.mxu0
    %v1722 = vadd.f32 %v1440, %v1721
    %v1723 = vpop.f32.mrf.mxu0
    %v1724 = vadd.f32 %v1444, %v1723
    %v1725 = vpop.f32.mrf.mxu0
    %v1726 = vpop.f32.mrf.mxu0
    %1727 = vdwg.mxu0
    %1728 = vmatprep.subr.bf16.mxu0 %v1638
    %1729 = vmatpush1.bf16.msra.mxu0 %v1637
    %1730 = vmatprep.subr.bf16.mxu0 %v1636
    %1731 = vmatpush1.bf16.msra.mxu0 %v1635
    %1732 = vmatprep.subr.bf16.mxu0 %v1634
    %1733 = vmatpush1.bf16.msra.mxu0 %v1633
    %1734 = vmatprep.subr.bf16.mxu0 %v1632
    %1735 = vmatpush1.bf16.msra.mxu0 %v1631
    %1736 = vmatprep.subr.bf16.mxu0 %v1630
    %1737 = vmatpush1.bf16.msra.mxu0 %v1629
    %1738 = vmatprep.subr.bf16.mxu0 %v1628
    %1739 = vmatpush1.bf16.msra.mxu0 %v1627
    %1740 = vmatprep.subr.bf16.mxu0 %v1626
    %1741 = vmatpush1.bf16.msra.mxu0 %v1625
    %1742 = vmatprep.subr.bf16.mxu0 %v1624
    %1743 = vmatpush1.bf16.msra.mxu0 %v1623
    %1744 = vmatprep.subr.bf16.mxu0 0
    %1745 = vmatpush2.bf16.msra.mxu0 0
    %1746 = vmatprep.subr.bf16.mxu0 0
    %1747 = vmatpush2.bf16.msra.mxu0 0
    %1748 = vmatprep.subr.bf16.mxu0 0
    %1749 = vmatpush2.bf16.msra.mxu0 0
    %1750 = vmatprep.subr.bf16.mxu0 0
    %1751 = vmatpush2.bf16.msra.mxu0 0
    %1752 = vmatprep.subr.bf16.mxu0 0
    %1753 = vmatpush2.bf16.msra.mxu0 0
    %1754 = vmatprep.subr.bf16.mxu0 0
    %1755 = vmatpush2.bf16.msra.mxu0 0
    %1756 = vmatprep.subr.bf16.mxu0 0
    %1757 = vmatpush2.bf16.msra.mxu0 0
    %1758 = vmatprep.subr.bf16.mxu0 0
    %1759 = vmatpush2.bf16.msra.mxu0 0
    %1760 = vmatprep.mubr.bf16.mxu0 0
    %1761 = vmatmul.mubr.bf16.gmra.mxu0 %v1386
    %v1762 = vpop.f32.mrf.mxu0
    %v1763 = vadd.f32 %v1722, %v1762
    %v1764 = vpop.f32.mrf.mxu0
    %v1765 = vadd.f32 %v1724, %v1764
    %v1766 = vpop.f32.mrf.mxu0
    %v1767 = vpop.f32.mrf.mxu0
    %1768 = vdwg.mxu0
    %v1769 = vmax.f32 %v1763, 0.0
    %v1770 = vmax.f32 %v1765, 0.0
    %v1771 = vpack.c.bf16 %v1769, %v1769
    %v1772 = vpack.c.bf16 %v1770, %v1770
    %v1773 = vld [vmem:[%s5] sm:$0xf]
    %v1774 = vld [vmem:[%s5 + $0x4] sm:$0xf]
    %v1775 = vld [vmem:[%s5 + $0x8] sm:$0xf]
    %v1776 = vld [vmem:[%s5 + $0xc] sm:$0xf]
    %v1777 = vld [vmem:[%s5 + $0x10] sm:$0xf]
    %v1778 = vld [vmem:[%s5 + $0x14] sm:$0xf]
    %v1779 = vld [vmem:[%s5 + $0x18] sm:$0xf]
    %v1780 = vld [vmem:[%s5 + $0x1c] sm:$0xf]
    %v1781 = vld [vmem:[%s5 + $0x20] sm:$0xf]
    %v1782 = vld [vmem:[%s5 + $0x24] sm:$0xf]
    %v1783 = vld [vmem:[%s5 + $0x28] sm:$0xf]
    %v1784 = vld [vmem:[%s5 + $0x2c] sm:$0xf]
    %v1785 = vld [vmem:[%s5 + $0x30] sm:$0xf]
    %v1786 = vld [vmem:[%s5 + $0x34] sm:$0xf]
    %v1787 = vld [vmem:[%s5 + $0x38] sm:$0xf]
    %v1788 = vld [vmem:[%s5 + $0x3c] sm:$0xf]
    %v1789 = vld [vmem:[%s5 + $0x40] sm:$0xf]
    %v1790 = vld [vmem:[%s5 + $0x44] sm:$0xf]
    %v1791 = vld [vmem:[%s5 + $0x48] sm:$0xf]
    %v1792 = vld [vmem:[%s5 + $0x4c] sm:$0xf]
    %v1793 = vld [vmem:[%s5 + $0x50] sm:$0xf]
    %v1794 = vld [vmem:[%s5 + $0x54] sm:$0xf]
    %v1795 = vld [vmem:[%s5 + $0x58] sm:$0xf]
    %v1796 = vld [vmem:[%s5 + $0x5c] sm:$0xf]
    %v1797 = vld [vmem:[%s5 + $0x60] sm:$0xf]
    %v1798 = vld [vmem:[%s5 + $0x64] sm:$0xf]
    %v1799 = vld [vmem:[%s5 + $0x68] sm:$0xf]
    %v1800 = vld [vmem:[%s5 + $0x6c] sm:$0xf]
    %v1801 = vld [vmem:[%s5 + $0x70] sm:$0xf]
    %v1802 = vld [vmem:[%s5 + $0x74] sm:$0xf]
    %v1803 = vld [vmem:[%s5 + $0x78] sm:$0xf]
    %v1804 = vld [vmem:[%s5 + $0x7c] sm:$0xf]
    %v1805 = vld [vmem:[%s6] sm:$0x1]
    %v1807 = vlaneseq
    %v1808 = vshrl.u32 %v1807, 7
    %v1809 = vsub.s32 0, %v1808
    %v1810 = vrot.slane %v1805, %v1809
    %v1844 = vunpack.c.l.b16 %v1773
    %v1845 = vunpack.c.l.b16 %v1774
    %v1846 = vunpack.c.l.b16 %v1775
    %v1847 = vunpack.c.l.b16 %v1776
    %v1848 = vunpack.c.l.b16 %v1777
    %v1849 = vunpack.c.l.b16 %v1778
    %v1850 = vunpack.c.l.b16 %v1779
    %v1851 = vunpack.c.l.b16 %v1780
    %v1852 = vunpack.c.l.b16 %v1781
    %v1853 = vunpack.c.l.b16 %v1782
    %v1854 = vunpack.c.l.b16 %v1783
    %v1855 = vunpack.c.l.b16 %v1784
    %v1856 = vunpack.c.l.b16 %v1785
    %v1857 = vunpack.c.l.b16 %v1786
    %v1858 = vunpack.c.l.b16 %v1787
    %v1859 = vunpack.c.l.b16 %v1788
    %v1860 = vunpack.c.l.b16 %v1789
    %v1861 = vunpack.c.l.b16 %v1790
    %v1862 = vunpack.c.l.b16 %v1791
    %v1863 = vunpack.c.l.b16 %v1792
    %v1864 = vunpack.c.l.b16 %v1793
    %v1865 = vunpack.c.l.b16 %v1794
    %v1866 = vunpack.c.l.b16 %v1795
    %v1867 = vunpack.c.l.b16 %v1796
    %v1868 = vunpack.c.l.b16 %v1797
    %v1869 = vunpack.c.l.b16 %v1798
    %v1870 = vunpack.c.l.b16 %v1799
    %v1871 = vunpack.c.l.b16 %v1800
    %v1872 = vunpack.c.l.b16 %v1801
    %v1873 = vunpack.c.l.b16 %v1802
    %v1874 = vunpack.c.l.b16 %v1803
    %v1875 = vunpack.c.l.b16 %v1804
    %v1876 = vpack.c.b16 %v1845, %v1844
    %v1877 = vpack.c.b16 %v1847, %v1846
    %v1878 = vpack.c.b16 %v1849, %v1848
    %v1879 = vpack.c.b16 %v1851, %v1850
    %v1880 = vpack.c.b16 %v1853, %v1852
    %v1881 = vpack.c.b16 %v1855, %v1854
    %v1882 = vpack.c.b16 %v1857, %v1856
    %v1883 = vpack.c.b16 %v1859, %v1858
    %v1884 = vpack.c.b16 %v1861, %v1860
    %v1885 = vpack.c.b16 %v1863, %v1862
    %v1886 = vpack.c.b16 %v1865, %v1864
    %v1887 = vpack.c.b16 %v1867, %v1866
    %v1888 = vpack.c.b16 %v1869, %v1868
    %v1889 = vpack.c.b16 %v1871, %v1870
    %v1890 = vpack.c.b16 %v1873, %v1872
    %v1891 = vpack.c.b16 %v1875, %v1874
    %1908 = vmatprep.subr.bf16.mxu0 0
    %1909 = vmatpush1.bf16.msra.mxu0 %v1883
    %1910 = vmatprep.subr.bf16.mxu0 0
    %1911 = vmatpush1.bf16.msra.mxu0 %v1882
    %1912 = vmatprep.subr.bf16.mxu0 0
    %1913 = vmatpush1.bf16.msra.mxu0 %v1881
    %1914 = vmatprep.subr.bf16.mxu0 0
    %1915 = vmatpush1.bf16.msra.mxu0 %v1880
    %1916 = vmatprep.subr.bf16.mxu0 0
    %1917 = vmatpush1.bf16.msra.mxu0 %v1879
    %1918 = vmatprep.subr.bf16.mxu0 0
    %1919 = vmatpush1.bf16.msra.mxu0 %v1878
    %1920 = vmatprep.subr.bf16.mxu0 0
    %1921 = vmatpush1.bf16.msra.mxu0 %v1877
    %1922 = vmatprep.subr.bf16.mxu0 0
    %1923 = vmatpush1.bf16.msra.mxu0 %v1876
    %1924 = vmatprep.subr.bf16.mxu0 0
    %1925 = vmatpush2.bf16.msra.mxu0 %v1891
    %1926 = vmatprep.subr.bf16.mxu0 0
    %1927 = vmatpush2.bf16.msra.mxu0 %v1890
    %1928 = vmatprep.subr.bf16.mxu0 0
    %1929 = vmatpush2.bf16.msra.mxu0 %v1889
    %1930 = vmatprep.subr.bf16.mxu0 0
    %1931 = vmatpush2.bf16.msra.mxu0 %v1888
    %1932 = vmatprep.subr.bf16.mxu0 0
    %1933 = vmatpush2.bf16.msra.mxu0 %v1887
    %1934 = vmatprep.subr.bf16.mxu0 0
    %1935 = vmatpush2.bf16.msra.mxu0 %v1886
    %1936 = vmatprep.subr.bf16.mxu0 0
    %1937 = vmatpush2.bf16.msra.mxu0 %v1885
    %1938 = vmatprep.subr.bf16.mxu0 0
    %1939 = vmatpush2.bf16.msra.mxu0 %v1884
    %1940 = vmatprep.mubr.bf16.mxu0 %v1772
    %1941 = vmatmul.mubr.bf16.gmra.mxu0 %v1771
    %v1942 = vpop.f32.mrf.mxu0
    %v1943 = vadd.f32 %v1810, %v1942
    %v1944 = vpop.f32.mrf.mxu0
    %v1945 = vpop.f32.mrf.mxu0
    %v1946 = vpop.f32.mrf.mxu0
    %1947 = vdwg.mxu0
    %1948 = vst [vmem:[#allocation5] sm:$0xff] %v1943
    // Predicated region
    $region34: #{neural_network_forward.1} parent=1 // pred_check
      _
    $region35: #{neural_network_forward.1} parent=1 // pred_check_branch
      %1950 = sbr.rel (0) target = $region37
    $region36: #{neural_network_forward.1} parent=1 // pred_region
      %s1952 = ssub.s32 128, 128
      %1953 = vsyncadd [#allocation4], %s1952
      %s1955 = sshll.u32 [#allocation5], 4
      %s1956 = int_to_ptr.vmem [resolvable:$true] %s1955
      %1958 = dma.vmem_to_hbm [thread:$0]  %s1956, 128, %s7, [#allocation4]
    $region37: #{neural_network_forward.1} parent=1 // pred_fallthru
      _
    // Predicated region
    $region38: #{neural_network_forward.1} parent=1 // pred_check
      _
    $region39: #{neural_network_forward.1} parent=1 // pred_check_branch
      %1960 = sbr.rel (0) target = $region41
    $region40: #{neural_network_forward.1} parent=1 // pred_region
      %1961 = dma.done [#allocation4], 128
    $region41: #{neural_network_forward.1} parent=1 // pred_fallthru
      _
    %1962 = vsyncpa [#allocation3], 1
    %1963 = vsyncpa [#allocation4], 1

</llo_original>
